<compile_context>
chip_gen: v7x
topology: tpu7x:2x2x1
jax: 0.10.0
libtpu: 0.0.40
codegen_flags: <defaults>
</compile_context>

<pallas_src>
import functools

import jax
import jax.numpy as jnp
from jax import lax
from jax.experimental import pallas as pl
from jax.experimental.pallas import tpu as pltpu


def _sepconv_kernel(taps_ref, wdw_ref, s1_ref, b1_ref, wpw_ref, s2_ref, b2_ref,
                    out_ref):
    # Depthwise 3x3 conv: 9 per-channel broadcast multiply-accumulates (VPU).
    acc = taps_ref[0] * wdw_ref[0]                      # (rows, C_in)
    for k in range(1, 9):
        acc = acc + taps_ref[k] * wdw_ref[k]

    # BatchNorm(in) + ReLU, folded into per-channel scale / bias.
    h = jnp.maximum(acc * s1_ref[...] + b1_ref[...], 0.0)

    # Pointwise 1x1 conv == channel matmul on the MXU (f32 accumulation).
    y = jnp.dot(h, wpw_ref[...], preferred_element_type=jnp.float32)

    # BatchNorm(out) + ReLU, single fused store.
    out_ref[...] = jnp.maximum(y * s2_ref[...] + b2_ref[...], 0.0)


@functools.partial(jax.jit, static_argnames=("stride",))
def separable_conv2d(x, params, *, stride):
    """x: (N, C_in, H, W) float32 (PyTorch NCHW).  Returns (N, C_out, H_out, W_out)."""
    eps = 1e-5
    row_block_cap = 1024

    n, c_in, h, w = x.shape
    c_out = params["w_pw"].shape[0]
    s = stride
    h_out = (h - 1) // s + 1          # kernel=3, padding=1
    w_out = (w - 1) // s + 1
    r = n * h_out * w_out

    # ---- wrapper-side layout plumbing (free in XLA) ------------------------
    x_nhwc = jnp.transpose(x, (0, 2, 3, 1)).astype(jnp.float32)
    x_pad = jnp.pad(x_nhwc, ((0, 0), (1, 1), (1, 1), (0, 0)))

    taps = []
    for dy in range(3):
        for dx in range(3):
            t = x_pad[:, dy:dy + s * (h_out - 1) + 1:s,
                      dx:dx + s * (w_out - 1) + 1:s, :]
            taps.append(t.reshape(r, c_in))
    taps = jnp.stack(taps, axis=0)                       # (9, R, C_in)

    # depthwise weight (C_in, 1, 3, 3) -> (9, 1, C_in), k = 3*dy + dx
    w_dw = jnp.transpose(params["w_dw"].reshape(c_in, 9), (1, 0)).reshape(
        9, 1, c_in)
    # pointwise weight (C_out, C_in, 1, 1) -> (C_in, C_out)
    w_pw = jnp.transpose(params["w_pw"].reshape(c_out, c_in), (1, 0))

    # Eval-mode BatchNorm folded into per-channel scale / bias.
    # TODO(synk): training-mode BN (batch statistics) would need an extra
    # in-kernel reduction over N*H*W; running stats (module.eval()) used here.
    s1 = params["bn1_gamma"] * lax.rsqrt(params["bn1_var"] + eps)
    b1 = params["bn1_beta"] - params["bn1_mean"] * s1
    s2 = params["bn2_gamma"] * lax.rsqrt(params["bn2_var"] + eps)
    b2 = params["bn2_beta"] - params["bn2_mean"] * s2

    # ---- row tiling ---------------------------------------------------------
    if r > row_block_cap:
        row_block = row_block_cap
    else:
        row_block = ((r + 7) // 8) * 8                   # sublane-aligned
    r_pad = ((r + row_block - 1) // row_block) * row_block
    if r_pad != r:
        taps = jnp.pad(taps, ((0, 0), (0, r_pad - r), (0, 0)))
    grid = (r_pad // row_block,)

    out = pl.pallas_call(
        _sepconv_kernel,
        out_shape=jax.ShapeDtypeStruct((r_pad, c_out), jnp.float32),
        grid_spec=pltpu.PrefetchScalarGridSpec(
            num_scalar_prefetch=0,
            grid=grid,
            in_specs=[
                pl.BlockSpec((9, row_block, c_in), lambda i: (0, i, 0)),  # taps
                pl.BlockSpec((9, 1, c_in), lambda i: (0, 0, 0)),          # w_dw
                pl.BlockSpec((1, c_in), lambda i: (0, 0)),                # s1
                pl.BlockSpec((1, c_in), lambda i: (0, 0)),                # b1
                pl.BlockSpec((c_in, c_out), lambda i: (0, 0)),            # w_pw
                pl.BlockSpec((1, c_out), lambda i: (0, 0)),               # s2
                pl.BlockSpec((1, c_out), lambda i: (0, 0)),               # b2
            ],
            out_specs=pl.BlockSpec((row_block, c_out), lambda i: (i, 0)),
        ),
        compiler_params=pltpu.CompilerParams(
            dimension_semantics=("parallel",)),
    )(taps, w_dw,
      s1.reshape(1, c_in), b1.reshape(1, c_in),
      w_pw,
      s2.reshape(1, c_out), b2.reshape(1, c_out))

    out = out[:r].reshape(n, h_out, w_out, c_out)
    return jnp.transpose(out, (0, 3, 1, 2))              # back to NCHW


# ---------------------------------------------------------------------------
# Parameter init (torch-like) and pure-JAX reference for correctness checking.
# ---------------------------------------------------------------------------
def init_params(key, in_channels, out_channels):
    ks = jax.random.split(key, 10)
    bound_dw = 1.0 / jnp.sqrt(jnp.float32(9))            # per-group fan-in 1*3*3
    w_dw = jax.random.uniform(ks[0], (in_channels, 1, 3, 3), jnp.float32,
                              -bound_dw, bound_dw)
    bound_pw = 1.0 / jnp.sqrt(jnp.float32(in_channels))
    w_pw = jax.random.uniform(ks[1], (out_channels, in_channels, 1, 1),
                              jnp.float32, -bound_pw, bound_pw)
    # Non-trivial eval-mode BN stats / affine so the check is meaningful.
    return {
        "w_dw": w_dw, "w_pw": w_pw,
        "bn1_gamma": jax.random.uniform(ks[2], (in_channels,), jnp.float32, 0.5, 1.5),
        "bn1_beta": 0.1 * jax.random.normal(ks[3], (in_channels,), jnp.float32),
        "bn1_mean": 0.1 * jax.random.normal(ks[4], (in_channels,), jnp.float32),
        "bn1_var": jax.random.uniform(ks[5], (in_channels,), jnp.float32, 0.5, 1.5),
        "bn2_gamma": jax.random.uniform(ks[6], (out_channels,), jnp.float32, 0.5, 1.5),
        "bn2_beta": 0.1 * jax.random.normal(ks[7], (out_channels,), jnp.float32),
        "bn2_mean": 0.1 * jax.random.normal(ks[8], (out_channels,), jnp.float32),
        "bn2_var": jax.random.uniform(ks[9], (out_channels,), jnp.float32, 0.5, 1.5),
    }


def reference(x, params, *, stride, eps=1e-5):
    c_in = x.shape[1]
    dn = ("NCHW", "OIHW", "NCHW")
    prec = jax.lax.Precision.HIGHEST

    def bn(v, g, b, m, var):
        return (g[None, :, None, None] * (v - m[None, :, None, None])
                * lax.rsqrt(var[None, :, None, None] + eps)
                + b[None, :, None, None])

    y = lax.conv_general_dilated(
        x, params["w_dw"], window_strides=(stride, stride),
        padding=((1, 1), (1, 1)), feature_group_count=c_in,
        dimension_numbers=dn, precision=prec)
    y = jnp.maximum(bn(y, params["bn1_gamma"], params["bn1_beta"],
                       params["bn1_mean"], params["bn1_var"]), 0.0)
    y = lax.conv_general_dilated(
        y, params["w_pw"], window_strides=(1, 1), padding=((0, 0), (0, 0)),
        dimension_numbers=dn, precision=prec)
    y = jnp.maximum(bn(y, params["bn2_gamma"], params["bn2_beta"],
                       params["bn2_mean"], params["bn2_var"]), 0.0)
    return y


if __name__ == "__main__":
    key = jax.random.PRNGKey(0)
    k_x, k_p = jax.random.split(key)

    n, c_in, c_out, hw = 2, 4, 8, 16
    x = jax.random.normal(k_x, (n, c_in, hw, hw), jnp.float32)
    params = init_params(k_p, c_in, c_out)

    for stride in (1, 2):
        out = separable_conv2d(x, params, stride=stride)
        jax.block_until_ready(out)

        ref = reference(x, params, stride=stride)
        h_out = (hw - 1) // stride + 1
        assert out.shape == (n, c_out, h_out, h_out), out.shape
        max_err = float(jnp.max(jnp.abs(out - ref)))
        assert jnp.allclose(out, ref, atol=1e-3, rtol=1e-3), max_err

    print("KERNEL_OK")
</pallas_src>

<mosaic_0001>
module attributes {stable_mosaic.version = 11 : i64} {
  func.func @_sepconv_kernel(%arg0: i32, %arg1: memref<9x512x4xf32, #tpu.memory_space<vmem>>, %arg2: memref<9x1x4xf32, #tpu.memory_space<vmem>>, %arg3: memref<1x4xf32, #tpu.memory_space<vmem>>, %arg4: memref<1x4xf32, #tpu.memory_space<vmem>>, %arg5: memref<4x8xf32, #tpu.memory_space<vmem>>, %arg6: memref<1x8xf32, #tpu.memory_space<vmem>>, %arg7: memref<1x8xf32, #tpu.memory_space<vmem>>, %arg8: memref<512x8xf32, #tpu.memory_space<vmem>>) attributes {dimension_semantics = [#tpu.dimension_semantics<parallel>], iteration_bounds = array<i64: 1>, scalar_prefetch = 0 : i64, scratch_operands = 0 : i64, tpu.core_type = #tpu.core_type<tc>, window_params = [{transform_indices = @transform_0, window_bounds = array<i64: 9, 512, 4>}, {pipeline_mode = #tpu.pipeline_mode<synchronous>, transform_indices = @transform_1, window_bounds = array<i64: 9, 1, 4>}, {pipeline_mode = #tpu.pipeline_mode<synchronous>, transform_indices = @transform_2, window_bounds = array<i64: 1, 4>}, {pipeline_mode = #tpu.pipeline_mode<synchronous>, transform_indices = @transform_3, window_bounds = array<i64: 1, 4>}, {pipeline_mode = #tpu.pipeline_mode<synchronous>, transform_indices = @transform_4, window_bounds = array<i64: 4, 8>}, {pipeline_mode = #tpu.pipeline_mode<synchronous>, transform_indices = @transform_5, window_bounds = array<i64: 1, 8>}, {pipeline_mode = #tpu.pipeline_mode<synchronous>, transform_indices = @transform_6, window_bounds = array<i64: 1, 8>}, {transform_indices = @transform_7, window_bounds = array<i64: 512, 8>}]} {
    %c0 = arith.constant 0 : index
    %c0_0 = arith.constant 0 : index
    %c0_1 = arith.constant 0 : index
    %0 = vector.load %arg1[%c0, %c0_0, %c0_1] : memref<9x512x4xf32, #tpu.memory_space<vmem>>, vector<1x512x4xf32>
    %1 = vector.shape_cast %0 : vector<1x512x4xf32> to vector<512x4xf32>
    %c0_2 = arith.constant 0 : index
    %c0_3 = arith.constant 0 : index
    %c0_4 = arith.constant 0 : index
    %2 = vector.load %arg2[%c0_2, %c0_3, %c0_4] : memref<9x1x4xf32, #tpu.memory_space<vmem>>, vector<1x1x4xf32>
    %3 = vector.shape_cast %2 : vector<1x1x4xf32> to vector<1x4xf32>
    %4 = vector.broadcast %3 : vector<1x4xf32> to vector<512x4xf32>
    %5 = arith.mulf %1, %4 : vector<512x4xf32>
    %c1 = arith.constant 1 : index
    %c0_5 = arith.constant 0 : index
    %c0_6 = arith.constant 0 : index
    %6 = vector.load %arg1[%c1, %c0_5, %c0_6] : memref<9x512x4xf32, #tpu.memory_space<vmem>>, vector<1x512x4xf32>
    %7 = vector.shape_cast %6 : vector<1x512x4xf32> to vector<512x4xf32>
    %c1_7 = arith.constant 1 : index
    %c0_8 = arith.constant 0 : index
    %c0_9 = arith.constant 0 : index
    %8 = vector.load %arg2[%c1_7, %c0_8, %c0_9] : memref<9x1x4xf32, #tpu.memory_space<vmem>>, vector<1x1x4xf32>
    %9 = vector.shape_cast %8 : vector<1x1x4xf32> to vector<1x4xf32>
    %10 = vector.broadcast %9 : vector<1x4xf32> to vector<512x4xf32>
    %11 = arith.mulf %7, %10 : vector<512x4xf32>
    %12 = arith.addf %5, %11 : vector<512x4xf32>
    %c2 = arith.constant 2 : index
    %c0_10 = arith.constant 0 : index
    %c0_11 = arith.constant 0 : index
    %13 = vector.load %arg1[%c2, %c0_10, %c0_11] : memref<9x512x4xf32, #tpu.memory_space<vmem>>, vector<1x512x4xf32>
    %14 = vector.shape_cast %13 : vector<1x512x4xf32> to vector<512x4xf32>
    %c2_12 = arith.constant 2 : index
    %c0_13 = arith.constant 0 : index
    %c0_14 = arith.constant 0 : index
    %15 = vector.load %arg2[%c2_12, %c0_13, %c0_14] : memref<9x1x4xf32, #tpu.memory_space<vmem>>, vector<1x1x4xf32>
    %16 = vector.shape_cast %15 : vector<1x1x4xf32> to vector<1x4xf32>
    %17 = vector.broadcast %16 : vector<1x4xf32> to vector<512x4xf32>
    %18 = arith.mulf %14, %17 : vector<512x4xf32>
    %19 = arith.addf %12, %18 : vector<512x4xf32>
    %c3 = arith.constant 3 : index
    %c0_15 = arith.constant 0 : index
    %c0_16 = arith.constant 0 : index
    %20 = vector.load %arg1[%c3, %c0_15, %c0_16] : memref<9x512x4xf32, #tpu.memory_space<vmem>>, vector<1x512x4xf32>
    %21 = vector.shape_cast %20 : vector<1x512x4xf32> to vector<512x4xf32>
    %c3_17 = arith.constant 3 : index
    %c0_18 = arith.constant 0 : index
    %c0_19 = arith.constant 0 : index
    %22 = vector.load %arg2[%c3_17, %c0_18, %c0_19] : memref<9x1x4xf32, #tpu.memory_space<vmem>>, vector<1x1x4xf32>
    %23 = vector.shape_cast %22 : vector<1x1x4xf32> to vector<1x4xf32>
    %24 = vector.broadcast %23 : vector<1x4xf32> to vector<512x4xf32>
    %25 = arith.mulf %21, %24 : vector<512x4xf32>
    %26 = arith.addf %19, %25 : vector<512x4xf32>
    %c4 = arith.constant 4 : index
    %c0_20 = arith.constant 0 : index
    %c0_21 = arith.constant 0 : index
    %27 = vector.load %arg1[%c4, %c0_20, %c0_21] : memref<9x512x4xf32, #tpu.memory_space<vmem>>, vector<1x512x4xf32>
    %28 = vector.shape_cast %27 : vector<1x512x4xf32> to vector<512x4xf32>
    %c4_22 = arith.constant 4 : index
    %c0_23 = arith.constant 0 : index
    %c0_24 = arith.constant 0 : index
    %29 = vector.load %arg2[%c4_22, %c0_23, %c0_24] : memref<9x1x4xf32, #tpu.memory_space<vmem>>, vector<1x1x4xf32>
    %30 = vector.shape_cast %29 : vector<1x1x4xf32> to vector<1x4xf32>
    %31 = vector.broadcast %30 : vector<1x4xf32> to vector<512x4xf32>
    %32 = arith.mulf %28, %31 : vector<512x4xf32>
    %33 = arith.addf %26, %32 : vector<512x4xf32>
    %c5 = arith.constant 5 : index
    %c0_25 = arith.constant 0 : index
    %c0_26 = arith.constant 0 : index
    %34 = vector.load %arg1[%c5, %c0_25, %c0_26] : memref<9x512x4xf32, #tpu.memory_space<vmem>>, vector<1x512x4xf32>
    %35 = vector.shape_cast %34 : vector<1x512x4xf32> to vector<512x4xf32>
    %c5_27 = arith.constant 5 : index
    %c0_28 = arith.constant 0 : index
    %c0_29 = arith.constant 0 : index
    %36 = vector.load %arg2[%c5_27, %c0_28, %c0_29] : memref<9x1x4xf32, #tpu.memory_space<vmem>>, vector<1x1x4xf32>
    %37 = vector.shape_cast %36 : vector<1x1x4xf32> to vector<1x4xf32>
    %38 = vector.broadcast %37 : vector<1x4xf32> to vector<512x4xf32>
    %39 = arith.mulf %35, %38 : vector<512x4xf32>
    %40 = arith.addf %33, %39 : vector<512x4xf32>
    %c6 = arith.constant 6 : index
    %c0_30 = arith.constant 0 : index
    %c0_31 = arith.constant 0 : index
    %41 = vector.load %arg1[%c6, %c0_30, %c0_31] : memref<9x512x4xf32, #tpu.memory_space<vmem>>, vector<1x512x4xf32>
    %42 = vector.shape_cast %41 : vector<1x512x4xf32> to vector<512x4xf32>
    %c6_32 = arith.constant 6 : index
    %c0_33 = arith.constant 0 : index
    %c0_34 = arith.constant 0 : index
    %43 = vector.load %arg2[%c6_32, %c0_33, %c0_34] : memref<9x1x4xf32, #tpu.memory_space<vmem>>, vector<1x1x4xf32>
    %44 = vector.shape_cast %43 : vector<1x1x4xf32> to vector<1x4xf32>
    %45 = vector.broadcast %44 : vector<1x4xf32> to vector<512x4xf32>
    %46 = arith.mulf %42, %45 : vector<512x4xf32>
    %47 = arith.addf %40, %46 : vector<512x4xf32>
    %c7 = arith.constant 7 : index
    %c0_35 = arith.constant 0 : index
    %c0_36 = arith.constant 0 : index
    %48 = vector.load %arg1[%c7, %c0_35, %c0_36] : memref<9x512x4xf32, #tpu.memory_space<vmem>>, vector<1x512x4xf32>
    %49 = vector.shape_cast %48 : vector<1x512x4xf32> to vector<512x4xf32>
    %c7_37 = arith.constant 7 : index
    %c0_38 = arith.constant 0 : index
    %c0_39 = arith.constant 0 : index
    %50 = vector.load %arg2[%c7_37, %c0_38, %c0_39] : memref<9x1x4xf32, #tpu.memory_space<vmem>>, vector<1x1x4xf32>
    %51 = vector.shape_cast %50 : vector<1x1x4xf32> to vector<1x4xf32>
    %52 = vector.broadcast %51 : vector<1x4xf32> to vector<512x4xf32>
    %53 = arith.mulf %49, %52 : vector<512x4xf32>
    %54 = arith.addf %47, %53 : vector<512x4xf32>
    %c8 = arith.constant 8 : index
    %c0_40 = arith.constant 0 : index
    %c0_41 = arith.constant 0 : index
    %55 = vector.load %arg1[%c8, %c0_40, %c0_41] : memref<9x512x4xf32, #tpu.memory_space<vmem>>, vector<1x512x4xf32>
    %56 = vector.shape_cast %55 : vector<1x512x4xf32> to vector<512x4xf32>
    %c8_42 = arith.constant 8 : index
    %c0_43 = arith.constant 0 : index
    %c0_44 = arith.constant 0 : index
    %57 = vector.load %arg2[%c8_42, %c0_43, %c0_44] : memref<9x1x4xf32, #tpu.memory_space<vmem>>, vector<1x1x4xf32>
    %58 = vector.shape_cast %57 : vector<1x1x4xf32> to vector<1x4xf32>
    %59 = vector.broadcast %58 : vector<1x4xf32> to vector<512x4xf32>
    %60 = arith.mulf %56, %59 : vector<512x4xf32>
    %61 = arith.addf %54, %60 : vector<512x4xf32>
    %c0_45 = arith.constant 0 : index
    %c0_46 = arith.constant 0 : index
    %62 = vector.load %arg3[%c0_45, %c0_46] : memref<1x4xf32, #tpu.memory_space<vmem>>, vector<1x4xf32>
    %63 = vector.broadcast %62 : vector<1x4xf32> to vector<512x4xf32>
    %64 = arith.mulf %61, %63 : vector<512x4xf32>
    %c0_47 = arith.constant 0 : index
    %c0_48 = arith.constant 0 : index
    %65 = vector.load %arg4[%c0_47, %c0_48] : memref<1x4xf32, #tpu.memory_space<vmem>>, vector<1x4xf32>
    %66 = vector.broadcast %65 : vector<1x4xf32> to vector<512x4xf32>
    %67 = arith.addf %64, %66 : vector<512x4xf32>
    %cst = arith.constant 0.000000e+00 : f32
    %68 = vector.broadcast %cst : f32 to vector<512x4xf32>
    %69 = arith.maximumf %67, %68 : vector<512x4xf32>
    %c0_49 = arith.constant 0 : index
    %c0_50 = arith.constant 0 : index
    %70 = vector.load %arg5[%c0_49, %c0_50] : memref<4x8xf32, #tpu.memory_space<vmem>>, vector<4x8xf32>
    %cst_51 = arith.constant dense<0.000000e+00> : vector<512x8xf32>
    %71 = tpu.matmul %69, %70, %cst_51 {dimension_numbers = #tpu.dot_dimension_numbers<[1], [0], [0], [1], [0, 0, 1, 1], [], []>} : vector<512x4xf32>, vector<4x8xf32>, vector<512x8xf32> -> vector<512x8xf32>
    %c0_52 = arith.constant 0 : index
    %c0_53 = arith.constant 0 : index
    %72 = vector.load %arg6[%c0_52, %c0_53] : memref<1x8xf32, #tpu.memory_space<vmem>>, vector<1x8xf32>
    %73 = vector.broadcast %72 : vector<1x8xf32> to vector<512x8xf32>
    %74 = arith.mulf %71, %73 : vector<512x8xf32>
    %c0_54 = arith.constant 0 : index
    %c0_55 = arith.constant 0 : index
    %75 = vector.load %arg7[%c0_54, %c0_55] : memref<1x8xf32, #tpu.memory_space<vmem>>, vector<1x8xf32>
    %76 = vector.broadcast %75 : vector<1x8xf32> to vector<512x8xf32>
    %77 = arith.addf %74, %76 : vector<512x8xf32>
    %cst_56 = arith.constant 0.000000e+00 : f32
    %78 = vector.broadcast %cst_56 : f32 to vector<512x8xf32>
    %79 = arith.maximumf %77, %78 : vector<512x8xf32>
    %c0_57 = arith.constant 0 : index
    %c0_58 = arith.constant 0 : index
    %80 = vector.load %arg8[%c0_57, %c0_58] : memref<512x8xf32, #tpu.memory_space<vmem>>, vector<512x8xf32>
    tpu.vector_store %arg8[%c0_57, %c0_58], %79 {strides = array<i32>} : memref<512x8xf32, #tpu.memory_space<vmem>>, vector<512x8xf32>,
    return
  }
  func.func @transform_0(%arg0: i32) -> (i32, i32, i32) {
    %c0_i32 = arith.constant 0 : i32
    %c0_i32_0 = arith.constant 0 : i32
    %c0_i32_1 = arith.constant 0 : i32
    return %c0_i32, %arg0, %c0_i32_0 : i32, i32, i32
  }
  func.func @transform_1(%arg0: i32) -> (i32, i32, i32) {
    %c0_i32 = arith.constant 0 : i32
    %c0_i32_0 = arith.constant 0 : i32
    %c0_i32_1 = arith.constant 0 : i32
    %c0_i32_2 = arith.constant 0 : i32
    return %c0_i32, %c0_i32_0, %c0_i32_1 : i32, i32, i32
  }
  func.func @transform_2(%arg0: i32) -> (i32, i32) {
    %c0_i32 = arith.constant 0 : i32
    %c0_i32_0 = arith.constant 0 : i32
    %c0_i32_1 = arith.constant 0 : i32
    return %c0_i32, %c0_i32_0 : i32, i32
  }
  func.func @transform_3(%arg0: i32) -> (i32, i32) {
    %c0_i32 = arith.constant 0 : i32
    %c0_i32_0 = arith.constant 0 : i32
    %c0_i32_1 = arith.constant 0 : i32
    return %c0_i32, %c0_i32_0 : i32, i32
  }
  func.func @transform_4(%arg0: i32) -> (i32, i32) {
    %c0_i32 = arith.constant 0 : i32
    %c0_i32_0 = arith.constant 0 : i32
    %c0_i32_1 = arith.constant 0 : i32
    return %c0_i32, %c0_i32_0 : i32, i32
  }
  func.func @transform_5(%arg0: i32) -> (i32, i32) {
    %c0_i32 = arith.constant 0 : i32
    %c0_i32_0 = arith.constant 0 : i32
    %c0_i32_1 = arith.constant 0 : i32
    return %c0_i32, %c0_i32_0 : i32, i32
  }
  func.func @transform_6(%arg0: i32) -> (i32, i32) {
    %c0_i32 = arith.constant 0 : i32
    %c0_i32_0 = arith.constant 0 : i32
    %c0_i32_1 = arith.constant 0 : i32
    return %c0_i32, %c0_i32_0 : i32, i32
  }
  func.func @transform_7(%arg0: i32) -> (i32, i32) {
    %c0_i32 = arith.constant 0 : i32
    %c0_i32_0 = arith.constant 0 : i32
    return %arg0, %c0_i32 : i32, i32
  }
}

</mosaic_0001>

<llo_original>
// kernel: separable_conv2d.1
$region0: #{separable_conv2d.1}
  #allocation0 [shape = 'u32[]', space=smem, size = 0x4, offset = 0x4, fixed_abs, tag = 'smem constant byte address 0x4 - core index']
  #allocation1 [shape = 'u32[144,128]{1,0:T(1,128)}', space=vmem, size = 0x12000, scoped, tag = 'internal scratch']
  %s0 = inlined_call_operand.vmem [shape: f32[9,512,4], index: 0, kind: input, shape index: {}]
  %s1 = inlined_call_operand.vmem [shape: f32[9,1,4], index: 1, kind: input, shape index: {}]
  %s2 = inlined_call_operand.vmem [shape: f32[1,4], index: 2, kind: input, shape index: {}]
  %s3 = inlined_call_operand.vmem [shape: f32[1,4], index: 3, kind: input, shape index: {}]
  %s4 = inlined_call_operand.vmem [shape: f32[4,8], index: 4, kind: input, shape index: {}]
  %s5 = inlined_call_operand.vmem [shape: f32[1,8], index: 5, kind: input, shape index: {}]
  %s6 = inlined_call_operand.vmem [shape: f32[1,8], index: 6, kind: input, shape index: {}]
  %s7 = inlined_call_operand.vmem [shape: f32[512,8], index: 7, kind: output, shape index: {}]
  %s8 = sld [smem:[#allocation0]]
  $region38: #{separable_conv2d.1} parent=0
    _
  %s10 = ssub.s32 1, %s8
  %s11 = scalar_select 0, %s10, %s8
  // Predicated region
  $region2: #{separable_conv2d.1} parent=0 // pred_check
    _
  $region3: #{separable_conv2d.1} parent=0 // pred_check_branch
    %13 = sbr.rel (0) target = $region5
  $region4: #{separable_conv2d.1} parent=0 // pred_region
    _
  $region5: #{separable_conv2d.1} parent=0 // pred_fallthru
    _
  // Predicated region
  $region6: #{separable_conv2d.1} parent=0 // pred_check
    _
  $region7: #{separable_conv2d.1} parent=0 // pred_check_branch
    %15 = sbr.rel (0) target = $region9
  $region8: #{separable_conv2d.1} parent=0 // pred_region
    _
  $region9: #{separable_conv2d.1} parent=0 // pred_fallthru
    _
  // Predicated region
  $region10: #{separable_conv2d.1} parent=0 // pred_check
    _
  $region11: #{separable_conv2d.1} parent=0 // pred_check_branch
    %17 = sbr.rel (0) target = $region13
  $region12: #{separable_conv2d.1} parent=0 // pred_region
    _
  $region13: #{separable_conv2d.1} parent=0 // pred_fallthru
    _
  // Predicated region
  $region14: #{separable_conv2d.1} parent=0 // pred_check
    _
  $region15: #{separable_conv2d.1} parent=0 // pred_check_branch
    %19 = sbr.rel (0) target = $region17
  $region16: #{separable_conv2d.1} parent=0 // pred_region
    _
  $region17: #{separable_conv2d.1} parent=0 // pred_fallthru
    _
  // Predicated region
  $region18: #{separable_conv2d.1} parent=0 // pred_check
    _
  $region19: #{separable_conv2d.1} parent=0 // pred_check_branch
    %21 = sbr.rel (0) target = $region21
  $region20: #{separable_conv2d.1} parent=0 // pred_region
    _
  $region21: #{separable_conv2d.1} parent=0 // pred_fallthru
    _
  // Predicated region
  $region22: #{separable_conv2d.1} parent=0 // pred_check
    _
  $region23: #{separable_conv2d.1} parent=0 // pred_check_branch
    %23 = sbr.rel (0) target = $region25
  $region24: #{separable_conv2d.1} parent=0 // pred_region
    _
  $region25: #{separable_conv2d.1} parent=0 // pred_fallthru
    _
  // Predicated region
  $region26: #{separable_conv2d.1} parent=0 // pred_check
    _
  $region27: #{separable_conv2d.1} parent=0 // pred_check_branch
    %25 = sbr.rel (0) target = $region29
  $region28: #{separable_conv2d.1} parent=0 // pred_region
    _
  $region29: #{separable_conv2d.1} parent=0 // pred_fallthru
    _
  %v26 = vld [vmem:[%s0] sm:$0xff]
  %v27 = vld [vmem:[%s0 + $0x8] sm:$0xff]
  %v28 = vld [vmem:[%s0 + $0x10] sm:$0xff]
  %v29 = vld [vmem:[%s0 + $0x18] sm:$0xff]
  %v30 = vld [vmem:[%s0 + $0x20] sm:$0xff]
  %v31 = vld [vmem:[%s0 + $0x28] sm:$0xff]
  %v32 = vld [vmem:[%s0 + $0x30] sm:$0xff]
  %v33 = vld [vmem:[%s0 + $0x38] sm:$0xff]
  %v34 = vld [vmem:[%s0 + $0x40] sm:$0xff]
  %v35 = vld [vmem:[%s0 + $0x48] sm:$0xff]
  %v36 = vld [vmem:[%s0 + $0x50] sm:$0xff]
  %v37 = vld [vmem:[%s0 + $0x58] sm:$0xff]
  %v38 = vld [vmem:[%s0 + $0x60] sm:$0xff]
  %v39 = vld [vmem:[%s0 + $0x68] sm:$0xff]
  %v40 = vld [vmem:[%s0 + $0x70] sm:$0xff]
  %v41 = vld [vmem:[%s0 + $0x78] sm:$0xff]
  %v42 = vld [vmem:[%s0 + $0x80] sm:$0xff]
  %v43 = vld [vmem:[%s0 + $0x88] sm:$0xff]
  %v44 = vld [vmem:[%s0 + $0x90] sm:$0xff]
  %v45 = vld [vmem:[%s0 + $0x98] sm:$0xff]
  %v46 = vld [vmem:[%s0 + $0xa0] sm:$0xff]
  %v47 = vld [vmem:[%s0 + $0xa8] sm:$0xff]
  %v48 = vld [vmem:[%s0 + $0xb0] sm:$0xff]
  %v49 = vld [vmem:[%s0 + $0xb8] sm:$0xff]
  %v50 = vld [vmem:[%s0 + $0xc0] sm:$0xff]
  %v51 = vld [vmem:[%s0 + $0xc8] sm:$0xff]
  %v52 = vld [vmem:[%s0 + $0xd0] sm:$0xff]
  %v53 = vld [vmem:[%s0 + $0xd8] sm:$0xff]
  %v54 = vld [vmem:[%s0 + $0xe0] sm:$0xff]
  %v55 = vld [vmem:[%s0 + $0xe8] sm:$0xff]
  %v56 = vld [vmem:[%s0 + $0xf0] sm:$0xff]
  %v57 = vld [vmem:[%s0 + $0xf8] sm:$0xff]
  %v58 = vld [vmem:[%s0 + $0x100] sm:$0xff]
  %v59 = vld [vmem:[%s0 + $0x108] sm:$0xff]
  %v60 = vld [vmem:[%s0 + $0x110] sm:$0xff]
  %v61 = vld [vmem:[%s0 + $0x118] sm:$0xff]
  %v62 = vld [vmem:[%s0 + $0x120] sm:$0xff]
  %v63 = vld [vmem:[%s0 + $0x128] sm:$0xff]
  %v64 = vld [vmem:[%s0 + $0x130] sm:$0xff]
  %v65 = vld [vmem:[%s0 + $0x138] sm:$0xff]
  %v66 = vld [vmem:[%s0 + $0x140] sm:$0xff]
  %v67 = vld [vmem:[%s0 + $0x148] sm:$0xff]
  %v68 = vld [vmem:[%s0 + $0x150] sm:$0xff]
  %v69 = vld [vmem:[%s0 + $0x158] sm:$0xff]
  %v70 = vld [vmem:[%s0 + $0x160] sm:$0xff]
  %v71 = vld [vmem:[%s0 + $0x168] sm:$0xff]
  %v72 = vld [vmem:[%s0 + $0x170] sm:$0xff]
  %v73 = vld [vmem:[%s0 + $0x178] sm:$0xff]
  %v74 = vld [vmem:[%s0 + $0x180] sm:$0xff]
  %v75 = vld [vmem:[%s0 + $0x188] sm:$0xff]
  %v76 = vld [vmem:[%s0 + $0x190] sm:$0xff]
  %v77 = vld [vmem:[%s0 + $0x198] sm:$0xff]
  %v78 = vld [vmem:[%s0 + $0x1a0] sm:$0xff]
  %v79 = vld [vmem:[%s0 + $0x1a8] sm:$0xff]
  %v80 = vld [vmem:[%s0 + $0x1b0] sm:$0xff]
  %v81 = vld [vmem:[%s0 + $0x1b8] sm:$0xff]
  %v82 = vld [vmem:[%s0 + $0x1c0] sm:$0xff]
  %v83 = vld [vmem:[%s0 + $0x1c8] sm:$0xff]
  %v84 = vld [vmem:[%s0 + $0x1d0] sm:$0xff]
  %v85 = vld [vmem:[%s0 + $0x1d8] sm:$0xff]
  %v86 = vld [vmem:[%s0 + $0x1e0] sm:$0xff]
  %v87 = vld [vmem:[%s0 + $0x1e8] sm:$0xff]
  %v88 = vld [vmem:[%s0 + $0x1f0] sm:$0xff]
  %v89 = vld [vmem:[%s0 + $0x1f8] sm:$0xff]
  %v90 = vld [vmem:[%s1] sm:$0x1]
  %v92 = vlaneseq
  %v93 = vshrl.u32 %v92, 7
  %v94 = vsub.s32 0, %v93
  %v95 = vrot.slane %v90, %v94
  %v97 = vmul.f32 %v26, %v95
  %v98 = vmul.f32 %v27, %v95
  %v99 = vmul.f32 %v28, %v95
  %v100 = vmul.f32 %v29, %v95
  %v101 = vmul.f32 %v30, %v95
  %v102 = vmul.f32 %v31, %v95
  %v103 = vmul.f32 %v32, %v95
  %v104 = vmul.f32 %v33, %v95
  %v105 = vmul.f32 %v34, %v95
  %v106 = vmul.f32 %v35, %v95
  %v107 = vmul.f32 %v36, %v95
  %v108 = vmul.f32 %v37, %v95
  %v109 = vmul.f32 %v38, %v95
  %v110 = vmul.f32 %v39, %v95
  %v111 = vmul.f32 %v40, %v95
  %v112 = vmul.f32 %v41, %v95
  %v113 = vmul.f32 %v42, %v95
  %v114 = vmul.f32 %v43, %v95
  %v115 = vmul.f32 %v44, %v95
  %v116 = vmul.f32 %v45, %v95
  %v117 = vmul.f32 %v46, %v95
  %v118 = vmul.f32 %v47, %v95
  %v119 = vmul.f32 %v48, %v95
  %v120 = vmul.f32 %v49, %v95
  %v121 = vmul.f32 %v50, %v95
  %v122 = vmul.f32 %v51, %v95
  %v123 = vmul.f32 %v52, %v95
  %v124 = vmul.f32 %v53, %v95
  %v125 = vmul.f32 %v54, %v95
  %v126 = vmul.f32 %v55, %v95
  %v127 = vmul.f32 %v56, %v95
  %v128 = vmul.f32 %v57, %v95
  %v129 = vmul.f32 %v58, %v95
  %v130 = vmul.f32 %v59, %v95
  %v131 = vmul.f32 %v60, %v95
  %v132 = vmul.f32 %v61, %v95
  %v133 = vmul.f32 %v62, %v95
  %v134 = vmul.f32 %v63, %v95
  %v135 = vmul.f32 %v64, %v95
  %v136 = vmul.f32 %v65, %v95
  %v137 = vmul.f32 %v66, %v95
  %v138 = vmul.f32 %v67, %v95
  %v139 = vmul.f32 %v68, %v95
  %v140 = vmul.f32 %v69, %v95
  %v141 = vmul.f32 %v70, %v95
  %v142 = vmul.f32 %v71, %v95
  %v143 = vmul.f32 %v72, %v95
  %v144 = vmul.f32 %v73, %v95
  %v145 = vmul.f32 %v74, %v95
  %v146 = vmul.f32 %v75, %v95
  %v147 = vmul.f32 %v76, %v95
  %v148 = vmul.f32 %v77, %v95
  %v149 = vmul.f32 %v78, %v95
  %v150 = vmul.f32 %v79, %v95
  %v151 = vmul.f32 %v80, %v95
  %v152 = vmul.f32 %v81, %v95
  %v153 = vmul.f32 %v82, %v95
  %v154 = vmul.f32 %v83, %v95
  %v155 = vmul.f32 %v84, %v95
  %v156 = vmul.f32 %v85, %v95
  %v157 = vmul.f32 %v86, %v95
  %v158 = vmul.f32 %v87, %v95
  %v159 = vmul.f32 %v88, %v95
  %v160 = vmul.f32 %v89, %v95
  %s161 = scalar_lea.vmem %s0, 512
  %v162 = vld [vmem:[%s161] sm:$0xff]
  %v163 = vld [vmem:[%s161 + $0x8] sm:$0xff]
  %v164 = vld [vmem:[%s161 + $0x10] sm:$0xff]
  %v165 = vld [vmem:[%s161 + $0x18] sm:$0xff]
  %v166 = vld [vmem:[%s161 + $0x20] sm:$0xff]
  %v167 = vld [vmem:[%s161 + $0x28] sm:$0xff]
  %v168 = vld [vmem:[%s161 + $0x30] sm:$0xff]
  %v169 = vld [vmem:[%s161 + $0x38] sm:$0xff]
  %v170 = vld [vmem:[%s161 + $0x40] sm:$0xff]
  %v171 = vld [vmem:[%s161 + $0x48] sm:$0xff]
  %v172 = vld [vmem:[%s161 + $0x50] sm:$0xff]
  %v173 = vld [vmem:[%s161 + $0x58] sm:$0xff]
  %v174 = vld [vmem:[%s161 + $0x60] sm:$0xff]
  %v175 = vld [vmem:[%s161 + $0x68] sm:$0xff]
  %v176 = vld [vmem:[%s161 + $0x70] sm:$0xff]
  %v177 = vld [vmem:[%s161 + $0x78] sm:$0xff]
  %v178 = vld [vmem:[%s161 + $0x80] sm:$0xff]
  %v179 = vld [vmem:[%s161 + $0x88] sm:$0xff]
  %v180 = vld [vmem:[%s161 + $0x90] sm:$0xff]
  %v181 = vld [vmem:[%s161 + $0x98] sm:$0xff]
  %v182 = vld [vmem:[%s161 + $0xa0] sm:$0xff]
  %v183 = vld [vmem:[%s161 + $0xa8] sm:$0xff]
  %v184 = vld [vmem:[%s161 + $0xb0] sm:$0xff]
  %v185 = vld [vmem:[%s161 + $0xb8] sm:$0xff]
  %v186 = vld [vmem:[%s161 + $0xc0] sm:$0xff]
  %v187 = vld [vmem:[%s161 + $0xc8] sm:$0xff]
  %v188 = vld [vmem:[%s161 + $0xd0] sm:$0xff]
  %v189 = vld [vmem:[%s161 + $0xd8] sm:$0xff]
  %v190 = vld [vmem:[%s161 + $0xe0] sm:$0xff]
  %v191 = vld [vmem:[%s161 + $0xe8] sm:$0xff]
  %v192 = vld [vmem:[%s161 + $0xf0] sm:$0xff]
  %v193 = vld [vmem:[%s161 + $0xf8] sm:$0xff]
  %v194 = vld [vmem:[%s161 + $0x100] sm:$0xff]
  %v195 = vld [vmem:[%s161 + $0x108] sm:$0xff]
  %v196 = vld [vmem:[%s161 + $0x110] sm:$0xff]
  %v197 = vld [vmem:[%s161 + $0x118] sm:$0xff]
  %v198 = vld [vmem:[%s161 + $0x120] sm:$0xff]
  %v199 = vld [vmem:[%s161 + $0x128] sm:$0xff]
  %v200 = vld [vmem:[%s161 + $0x130] sm:$0xff]
  %v201 = vld [vmem:[%s161 + $0x138] sm:$0xff]
  %v202 = vld [vmem:[%s161 + $0x140] sm:$0xff]
  %v203 = vld [vmem:[%s161 + $0x148] sm:$0xff]
  %v204 = vld [vmem:[%s161 + $0x150] sm:$0xff]
  %v205 = vld [vmem:[%s161 + $0x158] sm:$0xff]
  %v206 = vld [vmem:[%s161 + $0x160] sm:$0xff]
  %v207 = vld [vmem:[%s161 + $0x168] sm:$0xff]
  %v208 = vld [vmem:[%s161 + $0x170] sm:$0xff]
  %v209 = vld [vmem:[%s161 + $0x178] sm:$0xff]
  %v210 = vld [vmem:[%s161 + $0x180] sm:$0xff]
  %v211 = vld [vmem:[%s161 + $0x188] sm:$0xff]
  %v212 = vld [vmem:[%s161 + $0x190] sm:$0xff]
  %v213 = vld [vmem:[%s161 + $0x198] sm:$0xff]
  %v214 = vld [vmem:[%s161 + $0x1a0] sm:$0xff]
  %v215 = vld [vmem:[%s161 + $0x1a8] sm:$0xff]
  %v216 = vld [vmem:[%s161 + $0x1b0] sm:$0xff]
  %v217 = vld [vmem:[%s161 + $0x1b8] sm:$0xff]
  %v218 = vld [vmem:[%s161 + $0x1c0] sm:$0xff]
  %v219 = vld [vmem:[%s161 + $0x1c8] sm:$0xff]
  %v220 = vld [vmem:[%s161 + $0x1d0] sm:$0xff]
  %v221 = vld [vmem:[%s161 + $0x1d8] sm:$0xff]
  %v222 = vld [vmem:[%s161 + $0x1e0] sm:$0xff]
  %v223 = vld [vmem:[%s161 + $0x1e8] sm:$0xff]
  %v224 = vld [vmem:[%s161 + $0x1f0] sm:$0xff]
  %v225 = vld [vmem:[%s161 + $0x1f8] sm:$0xff]
  %s226 = scalar_lea.vmem %s1, 1
  %v227 = vld [vmem:[%s226] sm:$0x1]
  %v229 = vlaneseq
  %v230 = vshrl.u32 %v229, 7
  %v231 = vsub.s32 0, %v230
  %v232 = vrot.slane %v227, %v231
  %v234 = vmul.f32 %v162, %v232
  %v235 = vmul.f32 %v163, %v232
  %v236 = vmul.f32 %v164, %v232
  %v237 = vmul.f32 %v165, %v232
  %v238 = vmul.f32 %v166, %v232
  %v239 = vmul.f32 %v167, %v232
  %v240 = vmul.f32 %v168, %v232
  %v241 = vmul.f32 %v169, %v232
  %v242 = vmul.f32 %v170, %v232
  %v243 = vmul.f32 %v171, %v232
  %v244 = vmul.f32 %v172, %v232
  %v245 = vmul.f32 %v173, %v232
  %v246 = vmul.f32 %v174, %v232
  %v247 = vmul.f32 %v175, %v232
  %v248 = vmul.f32 %v176, %v232
  %v249 = vmul.f32 %v177, %v232
  %v250 = vmul.f32 %v178, %v232
  %v251 = vmul.f32 %v179, %v232
  %v252 = vmul.f32 %v180, %v232
  %v253 = vmul.f32 %v181, %v232
  %v254 = vmul.f32 %v182, %v232
  %v255 = vmul.f32 %v183, %v232
  %v256 = vmul.f32 %v184, %v232
  %v257 = vmul.f32 %v185, %v232
  %v258 = vmul.f32 %v186, %v232
  %v259 = vmul.f32 %v187, %v232
  %v260 = vmul.f32 %v188, %v232
  %v261 = vmul.f32 %v189, %v232
  %v262 = vmul.f32 %v190, %v232
  %v263 = vmul.f32 %v191, %v232
  %v264 = vmul.f32 %v192, %v232
  %v265 = vmul.f32 %v193, %v232
  %v266 = vmul.f32 %v194, %v232
  %v267 = vmul.f32 %v195, %v232
  %v268 = vmul.f32 %v196, %v232
  %v269 = vmul.f32 %v197, %v232
  %v270 = vmul.f32 %v198, %v232
  %v271 = vmul.f32 %v199, %v232
  %v272 = vmul.f32 %v200, %v232
  %v273 = vmul.f32 %v201, %v232
  %v274 = vmul.f32 %v202, %v232
  %v275 = vmul.f32 %v203, %v232
  %v276 = vmul.f32 %v204, %v232
  %v277 = vmul.f32 %v205, %v232
  %v278 = vmul.f32 %v206, %v232
  %v279 = vmul.f32 %v207, %v232
  %v280 = vmul.f32 %v208, %v232
  %v281 = vmul.f32 %v209, %v232
  %v282 = vmul.f32 %v210, %v232
  %v283 = vmul.f32 %v211, %v232
  %v284 = vmul.f32 %v212, %v232
  %v285 = vmul.f32 %v213, %v232
  %v286 = vmul.f32 %v214, %v232
  %v287 = vmul.f32 %v215, %v232
  %v288 = vmul.f32 %v216, %v232
  %v289 = vmul.f32 %v217, %v232
  %v290 = vmul.f32 %v218, %v232
  %v291 = vmul.f32 %v219, %v232
  %v292 = vmul.f32 %v220, %v232
  %v293 = vmul.f32 %v221, %v232
  %v294 = vmul.f32 %v222, %v232
  %v295 = vmul.f32 %v223, %v232
  %v296 = vmul.f32 %v224, %v232
  %v297 = vmul.f32 %v225, %v232
  %v298 = vadd.f32 %v97, %v234
  %v299 = vadd.f32 %v98, %v235
  %v300 = vadd.f32 %v99, %v236
  %v301 = vadd.f32 %v100, %v237
  %v302 = vadd.f32 %v101, %v238
  %v303 = vadd.f32 %v102, %v239
  %v304 = vadd.f32 %v103, %v240
  %v305 = vadd.f32 %v104, %v241
  %v306 = vadd.f32 %v105, %v242
  %v307 = vadd.f32 %v106, %v243
  %v308 = vadd.f32 %v107, %v244
  %v309 = vadd.f32 %v108, %v245
  %v310 = vadd.f32 %v109, %v246
  %v311 = vadd.f32 %v110, %v247
  %v312 = vadd.f32 %v111, %v248
  %v313 = vadd.f32 %v112, %v249
  %v314 = vadd.f32 %v113, %v250
  %v315 = vadd.f32 %v114, %v251
  %v316 = vadd.f32 %v115, %v252
  %v317 = vadd.f32 %v116, %v253
  %v318 = vadd.f32 %v117, %v254
  %v319 = vadd.f32 %v118, %v255
  %v320 = vadd.f32 %v119, %v256
  %v321 = vadd.f32 %v120, %v257
  %v322 = vadd.f32 %v121, %v258
  %v323 = vadd.f32 %v122, %v259
  %v324 = vadd.f32 %v123, %v260
  %v325 = vadd.f32 %v124, %v261
  %v326 = vadd.f32 %v125, %v262
  %v327 = vadd.f32 %v126, %v263
  %v328 = vadd.f32 %v127, %v264
  %v329 = vadd.f32 %v128, %v265
  %v330 = vadd.f32 %v129, %v266
  %v331 = vadd.f32 %v130, %v267
  %v332 = vadd.f32 %v131, %v268
  %v333 = vadd.f32 %v132, %v269
  %v334 = vadd.f32 %v133, %v270
  %v335 = vadd.f32 %v134, %v271
  %v336 = vadd.f32 %v135, %v272
  %v337 = vadd.f32 %v136, %v273
  %v338 = vadd.f32 %v137, %v274
  %v339 = vadd.f32 %v138, %v275
  %v340 = vadd.f32 %v139, %v276
  %v341 = vadd.f32 %v140, %v277
  %v342 = vadd.f32 %v141, %v278
  %v343 = vadd.f32 %v142, %v279
  %v344 = vadd.f32 %v143, %v280
  %v345 = vadd.f32 %v144, %v281
  %v346 = vadd.f32 %v145, %v282
  %v347 = vadd.f32 %v146, %v283
  %v348 = vadd.f32 %v147, %v284
  %v349 = vadd.f32 %v148, %v285
  %v350 = vadd.f32 %v149, %v286
  %v351 = vadd.f32 %v150, %v287
  %v352 = vadd.f32 %v151, %v288
  %v353 = vadd.f32 %v152, %v289
  %v354 = vadd.f32 %v153, %v290
  %v355 = vadd.f32 %v154, %v291
  %v356 = vadd.f32 %v155, %v292
  %v357 = vadd.f32 %v156, %v293
  %v358 = vadd.f32 %v157, %v294
  %v359 = vadd.f32 %v158, %v295
  %v360 = vadd.f32 %v159, %v296
  %v361 = vadd.f32 %v160, %v297
  %s362 = scalar_lea.vmem %s0, 1024
  %v363 = vld [vmem:[%s362] sm:$0xff]
  %v364 = vld [vmem:[%s362 + $0x8] sm:$0xff]
  %v365 = vld [vmem:[%s362 + $0x10] sm:$0xff]
  %v366 = vld [vmem:[%s362 + $0x18] sm:$0xff]
  %v367 = vld [vmem:[%s362 + $0x20] sm:$0xff]
  %v368 = vld [vmem:[%s362 + $0x28] sm:$0xff]
  %v369 = vld [vmem:[%s362 + $0x30] sm:$0xff]
  %v370 = vld [vmem:[%s362 + $0x38] sm:$0xff]
  %v371 = vld [vmem:[%s362 + $0x40] sm:$0xff]
  %v372 = vld [vmem:[%s362 + $0x48] sm:$0xff]
  %v373 = vld [vmem:[%s362 + $0x50] sm:$0xff]
  %v374 = vld [vmem:[%s362 + $0x58] sm:$0xff]
  %v375 = vld [vmem:[%s362 + $0x60] sm:$0xff]
  %v376 = vld [vmem:[%s362 + $0x68] sm:$0xff]
  %v377 = vld [vmem:[%s362 + $0x70] sm:$0xff]
  %v378 = vld [vmem:[%s362 + $0x78] sm:$0xff]
  %v379 = vld [vmem:[%s362 + $0x80] sm:$0xff]
  %v380 = vld [vmem:[%s362 + $0x88] sm:$0xff]
  %v381 = vld [vmem:[%s362 + $0x90] sm:$0xff]
  %v382 = vld [vmem:[%s362 + $0x98] sm:$0xff]
  %v383 = vld [vmem:[%s362 + $0xa0] sm:$0xff]
  %v384 = vld [vmem:[%s362 + $0xa8] sm:$0xff]
  %v385 = vld [vmem:[%s362 + $0xb0] sm:$0xff]
  %v386 = vld [vmem:[%s362 + $0xb8] sm:$0xff]
  %v387 = vld [vmem:[%s362 + $0xc0] sm:$0xff]
  %v388 = vld [vmem:[%s362 + $0xc8] sm:$0xff]
  %v389 = vld [vmem:[%s362 + $0xd0] sm:$0xff]
  %v390 = vld [vmem:[%s362 + $0xd8] sm:$0xff]
  %v391 = vld [vmem:[%s362 + $0xe0] sm:$0xff]
  %v392 = vld [vmem:[%s362 + $0xe8] sm:$0xff]
  %v393 = vld [vmem:[%s362 + $0xf0] sm:$0xff]
  %v394 = vld [vmem:[%s362 + $0xf8] sm:$0xff]
  %v395 = vld [vmem:[%s362 + $0x100] sm:$0xff]
  %v396 = vld [vmem:[%s362 + $0x108] sm:$0xff]
  %v397 = vld [vmem:[%s362 + $0x110] sm:$0xff]
  %v398 = vld [vmem:[%s362 + $0x118] sm:$0xff]
  %v399 = vld [vmem:[%s362 + $0x120] sm:$0xff]
  %v400 = vld [vmem:[%s362 + $0x128] sm:$0xff]
  %v401 = vld [vmem:[%s362 + $0x130] sm:$0xff]
  %v402 = vld [vmem:[%s362 + $0x138] sm:$0xff]
  %v403 = vld [vmem:[%s362 + $0x140] sm:$0xff]
  %v404 = vld [vmem:[%s362 + $0x148] sm:$0xff]
  %v405 = vld [vmem:[%s362 + $0x150] sm:$0xff]
  %v406 = vld [vmem:[%s362 + $0x158] sm:$0xff]
  %v407 = vld [vmem:[%s362 + $0x160] sm:$0xff]
  %v408 = vld [vmem:[%s362 + $0x168] sm:$0xff]
  %v409 = vld [vmem:[%s362 + $0x170] sm:$0xff]
  %v410 = vld [vmem:[%s362 + $0x178] sm:$0xff]
  %v411 = vld [vmem:[%s362 + $0x180] sm:$0xff]
  %v412 = vld [vmem:[%s362 + $0x188] sm:$0xff]
  %v413 = vld [vmem:[%s362 + $0x190] sm:$0xff]
  %v414 = vld [vmem:[%s362 + $0x198] sm:$0xff]
  %v415 = vld [vmem:[%s362 + $0x1a0] sm:$0xff]
  %v416 = vld [vmem:[%s362 + $0x1a8] sm:$0xff]
  %v417 = vld [vmem:[%s362 + $0x1b0] sm:$0xff]
  %v418 = vld [vmem:[%s362 + $0x1b8] sm:$0xff]
  %v419 = vld [vmem:[%s362 + $0x1c0] sm:$0xff]
  %v420 = vld [vmem:[%s362 + $0x1c8] sm:$0xff]
  %v421 = vld [vmem:[%s362 + $0x1d0] sm:$0xff]
  %v422 = vld [vmem:[%s362 + $0x1d8] sm:$0xff]
  %v423 = vld [vmem:[%s362 + $0x1e0] sm:$0xff]
  %v424 = vld [vmem:[%s362 + $0x1e8] sm:$0xff]
  %v425 = vld [vmem:[%s362 + $0x1f0] sm:$0xff]
  %v426 = vld [vmem:[%s362 + $0x1f8] sm:$0xff]
  %s427 = scalar_lea.vmem %s1, 2
  %v428 = vld [vmem:[%s427] sm:$0x1]
  %v430 = vlaneseq
  %v431 = vshrl.u32 %v430, 7
  %v432 = vsub.s32 0, %v431
  %v433 = vrot.slane %v428, %v432
  %v435 = vmul.f32 %v363, %v433
  %v436 = vmul.f32 %v364, %v433
  %v437 = vmul.f32 %v365, %v433
  %v438 = vmul.f32 %v366, %v433
  %v439 = vmul.f32 %v367, %v433
  %v440 = vmul.f32 %v368, %v433
  %v441 = vmul.f32 %v369, %v433
  %v442 = vmul.f32 %v370, %v433
  %v443 = vmul.f32 %v371, %v433
  %v444 = vmul.f32 %v372, %v433
  %v445 = vmul.f32 %v373, %v433
  %v446 = vmul.f32 %v374, %v433
  %v447 = vmul.f32 %v375, %v433
  %v448 = vmul.f32 %v376, %v433
  %v449 = vmul.f32 %v377, %v433
  %v450 = vmul.f32 %v378, %v433
  %v451 = vmul.f32 %v379, %v433
  %v452 = vmul.f32 %v380, %v433
  %v453 = vmul.f32 %v381, %v433
  %v454 = vmul.f32 %v382, %v433
  %v455 = vmul.f32 %v383, %v433
  %v456 = vmul.f32 %v384, %v433
  %v457 = vmul.f32 %v385, %v433
  %v458 = vmul.f32 %v386, %v433
  %v459 = vmul.f32 %v387, %v433
  %v460 = vmul.f32 %v388, %v433
  %v461 = vmul.f32 %v389, %v433
  %v462 = vmul.f32 %v390, %v433
  %v463 = vmul.f32 %v391, %v433
  %v464 = vmul.f32 %v392, %v433
  %v465 = vmul.f32 %v393, %v433
  %v466 = vmul.f32 %v394, %v433
  %v467 = vmul.f32 %v395, %v433
  %v468 = vmul.f32 %v396, %v433
  %v469 = vmul.f32 %v397, %v433
  %v470 = vmul.f32 %v398, %v433
  %v471 = vmul.f32 %v399, %v433
  %v472 = vmul.f32 %v400, %v433
  %v473 = vmul.f32 %v401, %v433
  %v474 = vmul.f32 %v402, %v433
  %v475 = vmul.f32 %v403, %v433
  %v476 = vmul.f32 %v404, %v433
  %v477 = vmul.f32 %v405, %v433
  %v478 = vmul.f32 %v406, %v433
  %v479 = vmul.f32 %v407, %v433
  %v480 = vmul.f32 %v408, %v433
  %v481 = vmul.f32 %v409, %v433
  %v482 = vmul.f32 %v410, %v433
  %v483 = vmul.f32 %v411, %v433
  %v484 = vmul.f32 %v412, %v433
  %v485 = vmul.f32 %v413, %v433
  %v486 = vmul.f32 %v414, %v433
  %v487 = vmul.f32 %v415, %v433
  %v488 = vmul.f32 %v416, %v433
  %v489 = vmul.f32 %v417, %v433
  %v490 = vmul.f32 %v418, %v433
  %v491 = vmul.f32 %v419, %v433
  %v492 = vmul.f32 %v420, %v433
  %v493 = vmul.f32 %v421, %v433
  %v494 = vmul.f32 %v422, %v433
  %v495 = vmul.f32 %v423, %v433
  %v496 = vmul.f32 %v424, %v433
  %v497 = vmul.f32 %v425, %v433
  %v498 = vmul.f32 %v426, %v433
  %v499 = vadd.f32 %v298, %v435
  %v500 = vadd.f32 %v299, %v436
  %v501 = vadd.f32 %v300, %v437
  %v502 = vadd.f32 %v301, %v438
  %v503 = vadd.f32 %v302, %v439
  %v504 = vadd.f32 %v303, %v440
  %v505 = vadd.f32 %v304, %v441
  %v506 = vadd.f32 %v305, %v442
  %v507 = vadd.f32 %v306, %v443
  %v508 = vadd.f32 %v307, %v444
  %v509 = vadd.f32 %v308, %v445
  %v510 = vadd.f32 %v309, %v446
  %v511 = vadd.f32 %v310, %v447
  %v512 = vadd.f32 %v311, %v448
  %v513 = vadd.f32 %v312, %v449
  %v514 = vadd.f32 %v313, %v450
  %v515 = vadd.f32 %v314, %v451
  %v516 = vadd.f32 %v315, %v452
  %v517 = vadd.f32 %v316, %v453
  %v518 = vadd.f32 %v317, %v454
  %v519 = vadd.f32 %v318, %v455
  %v520 = vadd.f32 %v319, %v456
  %v521 = vadd.f32 %v320, %v457
  %v522 = vadd.f32 %v321, %v458
  %v523 = vadd.f32 %v322, %v459
  %v524 = vadd.f32 %v323, %v460
  %v525 = vadd.f32 %v324, %v461
  %v526 = vadd.f32 %v325, %v462
  %v527 = vadd.f32 %v326, %v463
  %v528 = vadd.f32 %v327, %v464
  %v529 = vadd.f32 %v328, %v465
  %v530 = vadd.f32 %v329, %v466
  %v531 = vadd.f32 %v330, %v467
  %v532 = vadd.f32 %v331, %v468
  %v533 = vadd.f32 %v332, %v469
  %v534 = vadd.f32 %v333, %v470
  %v535 = vadd.f32 %v334, %v471
  %v536 = vadd.f32 %v335, %v472
  %v537 = vadd.f32 %v336, %v473
  %v538 = vadd.f32 %v337, %v474
  %v539 = vadd.f32 %v338, %v475
  %v540 = vadd.f32 %v339, %v476
  %v541 = vadd.f32 %v340, %v477
  %v542 = vadd.f32 %v341, %v478
  %v543 = vadd.f32 %v342, %v479
  %v544 = vadd.f32 %v343, %v480
  %v545 = vadd.f32 %v344, %v481
  %v546 = vadd.f32 %v345, %v482
  %v547 = vadd.f32 %v346, %v483
  %v548 = vadd.f32 %v347, %v484
  %v549 = vadd.f32 %v348, %v485
  %v550 = vadd.f32 %v349, %v486
  %v551 = vadd.f32 %v350, %v487
  %v552 = vadd.f32 %v351, %v488
  %v553 = vadd.f32 %v352, %v489
  %v554 = vadd.f32 %v353, %v490
  %v555 = vadd.f32 %v354, %v491
  %v556 = vadd.f32 %v355, %v492
  %v557 = vadd.f32 %v356, %v493
  %v558 = vadd.f32 %v357, %v494
  %v559 = vadd.f32 %v358, %v495
  %v560 = vadd.f32 %v359, %v496
  %v561 = vadd.f32 %v360, %v497
  %v562 = vadd.f32 %v361, %v498
  %s563 = scalar_lea.vmem %s0, 1536
  %v564 = vld [vmem:[%s563] sm:$0xff]
  %v565 = vld [vmem:[%s563 + $0x8] sm:$0xff]
  %v566 = vld [vmem:[%s563 + $0x10] sm:$0xff]
  %v567 = vld [vmem:[%s563 + $0x18] sm:$0xff]
  %v568 = vld [vmem:[%s563 + $0x20] sm:$0xff]
  %v569 = vld [vmem:[%s563 + $0x28] sm:$0xff]
  %v570 = vld [vmem:[%s563 + $0x30] sm:$0xff]
  %v571 = vld [vmem:[%s563 + $0x38] sm:$0xff]
  %v572 = vld [vmem:[%s563 + $0x40] sm:$0xff]
  %v573 = vld [vmem:[%s563 + $0x48] sm:$0xff]
  %v574 = vld [vmem:[%s563 + $0x50] sm:$0xff]
  %v575 = vld [vmem:[%s563 + $0x58] sm:$0xff]
  %v576 = vld [vmem:[%s563 + $0x60] sm:$0xff]
  %v577 = vld [vmem:[%s563 + $0x68] sm:$0xff]
  %v578 = vld [vmem:[%s563 + $0x70] sm:$0xff]
  %v579 = vld [vmem:[%s563 + $0x78] sm:$0xff]
  %v580 = vld [vmem:[%s563 + $0x80] sm:$0xff]
  %v581 = vld [vmem:[%s563 + $0x88] sm:$0xff]
  %v582 = vld [vmem:[%s563 + $0x90] sm:$0xff]
  %v583 = vld [vmem:[%s563 + $0x98] sm:$0xff]
  %v584 = vld [vmem:[%s563 + $0xa0] sm:$0xff]
  %v585 = vld [vmem:[%s563 + $0xa8] sm:$0xff]
  %v586 = vld [vmem:[%s563 + $0xb0] sm:$0xff]
  %v587 = vld [vmem:[%s563 + $0xb8] sm:$0xff]
  %v588 = vld [vmem:[%s563 + $0xc0] sm:$0xff]
  %v589 = vld [vmem:[%s563 + $0xc8] sm:$0xff]
  %v590 = vld [vmem:[%s563 + $0xd0] sm:$0xff]
  %v591 = vld [vmem:[%s563 + $0xd8] sm:$0xff]
  %v592 = vld [vmem:[%s563 + $0xe0] sm:$0xff]
  %v593 = vld [vmem:[%s563 + $0xe8] sm:$0xff]
  %v594 = vld [vmem:[%s563 + $0xf0] sm:$0xff]
  %v595 = vld [vmem:[%s563 + $0xf8] sm:$0xff]
  %v596 = vld [vmem:[%s563 + $0x100] sm:$0xff]
  %v597 = vld [vmem:[%s563 + $0x108] sm:$0xff]
  %v598 = vld [vmem:[%s563 + $0x110] sm:$0xff]
  %v599 = vld [vmem:[%s563 + $0x118] sm:$0xff]
  %v600 = vld [vmem:[%s563 + $0x120] sm:$0xff]
  %v601 = vld [vmem:[%s563 + $0x128] sm:$0xff]
  %v602 = vld [vmem:[%s563 + $0x130] sm:$0xff]
  %v603 = vld [vmem:[%s563 + $0x138] sm:$0xff]
  %v604 = vld [vmem:[%s563 + $0x140] sm:$0xff]
  %v605 = vld [vmem:[%s563 + $0x148] sm:$0xff]
  %v606 = vld [vmem:[%s563 + $0x150] sm:$0xff]
  %v607 = vld [vmem:[%s563 + $0x158] sm:$0xff]
  %v608 = vld [vmem:[%s563 + $0x160] sm:$0xff]
  %v609 = vld [vmem:[%s563 + $0x168] sm:$0xff]
  %v610 = vld [vmem:[%s563 + $0x170] sm:$0xff]
  %v611 = vld [vmem:[%s563 + $0x178] sm:$0xff]
  %v612 = vld [vmem:[%s563 + $0x180] sm:$0xff]
  %v613 = vld [vmem:[%s563 + $0x188] sm:$0xff]
  %v614 = vld [vmem:[%s563 + $0x190] sm:$0xff]
  %v615 = vld [vmem:[%s563 + $0x198] sm:$0xff]
  %v616 = vld [vmem:[%s563 + $0x1a0] sm:$0xff]
  %v617 = vld [vmem:[%s563 + $0x1a8] sm:$0xff]
  %v618 = vld [vmem:[%s563 + $0x1b0] sm:$0xff]
  %v619 = vld [vmem:[%s563 + $0x1b8] sm:$0xff]
  %v620 = vld [vmem:[%s563 + $0x1c0] sm:$0xff]
  %v621 = vld [vmem:[%s563 + $0x1c8] sm:$0xff]
  %v622 = vld [vmem:[%s563 + $0x1d0] sm:$0xff]
  %v623 = vld [vmem:[%s563 + $0x1d8] sm:$0xff]
  %v624 = vld [vmem:[%s563 + $0x1e0] sm:$0xff]
  %v625 = vld [vmem:[%s563 + $0x1e8] sm:$0xff]
  %v626 = vld [vmem:[%s563 + $0x1f0] sm:$0xff]
  %v627 = vld [vmem:[%s563 + $0x1f8] sm:$0xff]
  %s628 = scalar_lea.vmem %s1, 3
  %v629 = vld [vmem:[%s628] sm:$0x1]
  %v631 = vlaneseq
  %v632 = vshrl.u32 %v631, 7
  %v633 = vsub.s32 0, %v632
  %v634 = vrot.slane %v629, %v633
  %v636 = vmul.f32 %v564, %v634
  %v637 = vmul.f32 %v565, %v634
  %v638 = vmul.f32 %v566, %v634
  %v639 = vmul.f32 %v567, %v634
  %v640 = vmul.f32 %v568, %v634
  %v641 = vmul.f32 %v569, %v634
  %v642 = vmul.f32 %v570, %v634
  %v643 = vmul.f32 %v571, %v634
  %v644 = vmul.f32 %v572, %v634
  %v645 = vmul.f32 %v573, %v634
  %v646 = vmul.f32 %v574, %v634
  %v647 = vmul.f32 %v575, %v634
  %v648 = vmul.f32 %v576, %v634
  %v649 = vmul.f32 %v577, %v634
  %v650 = vmul.f32 %v578, %v634
  %v651 = vmul.f32 %v579, %v634
  %v652 = vmul.f32 %v580, %v634
  %v653 = vmul.f32 %v581, %v634
  %v654 = vmul.f32 %v582, %v634
  %v655 = vmul.f32 %v583, %v634
  %v656 = vmul.f32 %v584, %v634
  %v657 = vmul.f32 %v585, %v634
  %v658 = vmul.f32 %v586, %v634
  %v659 = vmul.f32 %v587, %v634
  %v660 = vmul.f32 %v588, %v634
  %v661 = vmul.f32 %v589, %v634
  %v662 = vmul.f32 %v590, %v634
  %v663 = vmul.f32 %v591, %v634
  %v664 = vmul.f32 %v592, %v634
  %v665 = vmul.f32 %v593, %v634
  %v666 = vmul.f32 %v594, %v634
  %v667 = vmul.f32 %v595, %v634
  %v668 = vmul.f32 %v596, %v634
  %v669 = vmul.f32 %v597, %v634
  %v670 = vmul.f32 %v598, %v634
  %v671 = vmul.f32 %v599, %v634
  %v672 = vmul.f32 %v600, %v634
  %v673 = vmul.f32 %v601, %v634
  %v674 = vmul.f32 %v602, %v634
  %v675 = vmul.f32 %v603, %v634
  %v676 = vmul.f32 %v604, %v634
  %v677 = vmul.f32 %v605, %v634
  %v678 = vmul.f32 %v606, %v634
  %v679 = vmul.f32 %v607, %v634
  %v680 = vmul.f32 %v608, %v634
  %v681 = vmul.f32 %v609, %v634
  %v682 = vmul.f32 %v610, %v634
  %v683 = vmul.f32 %v611, %v634
  %v684 = vmul.f32 %v612, %v634
  %v685 = vmul.f32 %v613, %v634
  %v686 = vmul.f32 %v614, %v634
  %v687 = vmul.f32 %v615, %v634
  %v688 = vmul.f32 %v616, %v634
  %v689 = vmul.f32 %v617, %v634
  %v690 = vmul.f32 %v618, %v634
  %v691 = vmul.f32 %v619, %v634
  %v692 = vmul.f32 %v620, %v634
  %v693 = vmul.f32 %v621, %v634
  %v694 = vmul.f32 %v622, %v634
  %v695 = vmul.f32 %v623, %v634
  %v696 = vmul.f32 %v624, %v634
  %v697 = vmul.f32 %v625, %v634
  %v698 = vmul.f32 %v626, %v634
  %v699 = vmul.f32 %v627, %v634
  %v700 = vadd.f32 %v499, %v636
  %v701 = vadd.f32 %v500, %v637
  %v702 = vadd.f32 %v501, %v638
  %v703 = vadd.f32 %v502, %v639
  %v704 = vadd.f32 %v503, %v640
  %v705 = vadd.f32 %v504, %v641
  %v706 = vadd.f32 %v505, %v642
  %v707 = vadd.f32 %v506, %v643
  %v708 = vadd.f32 %v507, %v644
  %v709 = vadd.f32 %v508, %v645
  %v710 = vadd.f32 %v509, %v646
  %v711 = vadd.f32 %v510, %v647
  %v712 = vadd.f32 %v511, %v648
  %v713 = vadd.f32 %v512, %v649
  %v714 = vadd.f32 %v513, %v650
  %v715 = vadd.f32 %v514, %v651
  %v716 = vadd.f32 %v515, %v652
  %v717 = vadd.f32 %v516, %v653
  %v718 = vadd.f32 %v517, %v654
  %v719 = vadd.f32 %v518, %v655
  %v720 = vadd.f32 %v519, %v656
  %v721 = vadd.f32 %v520, %v657
  %v722 = vadd.f32 %v521, %v658
  %v723 = vadd.f32 %v522, %v659
  %v724 = vadd.f32 %v523, %v660
  %v725 = vadd.f32 %v524, %v661
  %v726 = vadd.f32 %v525, %v662
  %v727 = vadd.f32 %v526, %v663
  %v728 = vadd.f32 %v527, %v664
  %v729 = vadd.f32 %v528, %v665
  %v730 = vadd.f32 %v529, %v666
  %v731 = vadd.f32 %v530, %v667
  %v732 = vadd.f32 %v531, %v668
  %v733 = vadd.f32 %v532, %v669
  %v734 = vadd.f32 %v533, %v670
  %v735 = vadd.f32 %v534, %v671
  %v736 = vadd.f32 %v535, %v672
  %v737 = vadd.f32 %v536, %v673
  %v738 = vadd.f32 %v537, %v674
  %v739 = vadd.f32 %v538, %v675
  %v740 = vadd.f32 %v539, %v676
  %v741 = vadd.f32 %v540, %v677
  %v742 = vadd.f32 %v541, %v678
  %v743 = vadd.f32 %v542, %v679
  %v744 = vadd.f32 %v543, %v680
  %v745 = vadd.f32 %v544, %v681
  %v746 = vadd.f32 %v545, %v682
  %v747 = vadd.f32 %v546, %v683
  %v748 = vadd.f32 %v547, %v684
  %v749 = vadd.f32 %v548, %v685
  %v750 = vadd.f32 %v549, %v686
  %v751 = vadd.f32 %v550, %v687
  %v752 = vadd.f32 %v551, %v688
  %v753 = vadd.f32 %v552, %v689
  %v754 = vadd.f32 %v553, %v690
  %v755 = vadd.f32 %v554, %v691
  %v756 = vadd.f32 %v555, %v692
  %v757 = vadd.f32 %v556, %v693
  %v758 = vadd.f32 %v557, %v694
  %v759 = vadd.f32 %v558, %v695
  %v760 = vadd.f32 %v559, %v696
  %v761 = vadd.f32 %v560, %v697
  %v762 = vadd.f32 %v561, %v698
  %v763 = vadd.f32 %v562, %v699
  %s764 = scalar_lea.vmem %s0, 2048
  %v765 = vld [vmem:[%s764] sm:$0xff]
  %v766 = vld [vmem:[%s764 + $0x8] sm:$0xff]
  %v767 = vld [vmem:[%s764 + $0x10] sm:$0xff]
  %v768 = vld [vmem:[%s764 + $0x18] sm:$0xff]
  %v769 = vld [vmem:[%s764 + $0x20] sm:$0xff]
  %v770 = vld [vmem:[%s764 + $0x28] sm:$0xff]
  %v771 = vld [vmem:[%s764 + $0x30] sm:$0xff]
  %v772 = vld [vmem:[%s764 + $0x38] sm:$0xff]
  %v773 = vld [vmem:[%s764 + $0x40] sm:$0xff]
  %v774 = vld [vmem:[%s764 + $0x48] sm:$0xff]
  %v775 = vld [vmem:[%s764 + $0x50] sm:$0xff]
  %v776 = vld [vmem:[%s764 + $0x58] sm:$0xff]
  %v777 = vld [vmem:[%s764 + $0x60] sm:$0xff]
  %v778 = vld [vmem:[%s764 + $0x68] sm:$0xff]
  %v779 = vld [vmem:[%s764 + $0x70] sm:$0xff]
  %v780 = vld [vmem:[%s764 + $0x78] sm:$0xff]
  %v781 = vld [vmem:[%s764 + $0x80] sm:$0xff]
  %v782 = vld [vmem:[%s764 + $0x88] sm:$0xff]
  %v783 = vld [vmem:[%s764 + $0x90] sm:$0xff]
  %v784 = vld [vmem:[%s764 + $0x98] sm:$0xff]
  %v785 = vld [vmem:[%s764 + $0xa0] sm:$0xff]
  %v786 = vld [vmem:[%s764 + $0xa8] sm:$0xff]
  %v787 = vld [vmem:[%s764 + $0xb0] sm:$0xff]
  %v788 = vld [vmem:[%s764 + $0xb8] sm:$0xff]
  %v789 = vld [vmem:[%s764 + $0xc0] sm:$0xff]
  %v790 = vld [vmem:[%s764 + $0xc8] sm:$0xff]
  %v791 = vld [vmem:[%s764 + $0xd0] sm:$0xff]
  %v792 = vld [vmem:[%s764 + $0xd8] sm:$0xff]
  %v793 = vld [vmem:[%s764 + $0xe0] sm:$0xff]
  %v794 = vld [vmem:[%s764 + $0xe8] sm:$0xff]
  %v795 = vld [vmem:[%s764 + $0xf0] sm:$0xff]
  %v796 = vld [vmem:[%s764 + $0xf8] sm:$0xff]
  %v797 = vld [vmem:[%s764 + $0x100] sm:$0xff]
  %v798 = vld [vmem:[%s764 + $0x108] sm:$0xff]
  %v799 = vld [vmem:[%s764 + $0x110] sm:$0xff]
  %v800 = vld [vmem:[%s764 + $0x118] sm:$0xff]
  %v801 = vld [vmem:[%s764 + $0x120] sm:$0xff]
  %v802 = vld [vmem:[%s764 + $0x128] sm:$0xff]
  %v803 = vld [vmem:[%s764 + $0x130] sm:$0xff]
  %v804 = vld [vmem:[%s764 + $0x138] sm:$0xff]
  %v805 = vld [vmem:[%s764 + $0x140] sm:$0xff]
  %v806 = vld [vmem:[%s764 + $0x148] sm:$0xff]
  %v807 = vld [vmem:[%s764 + $0x150] sm:$0xff]
  %v808 = vld [vmem:[%s764 + $0x158] sm:$0xff]
  %v809 = vld [vmem:[%s764 + $0x160] sm:$0xff]
  %v810 = vld [vmem:[%s764 + $0x168] sm:$0xff]
  %v811 = vld [vmem:[%s764 + $0x170] sm:$0xff]
  %v812 = vld [vmem:[%s764 + $0x178] sm:$0xff]
  %v813 = vld [vmem:[%s764 + $0x180] sm:$0xff]
  %v814 = vld [vmem:[%s764 + $0x188] sm:$0xff]
  %v815 = vld [vmem:[%s764 + $0x190] sm:$0xff]
  %v816 = vld [vmem:[%s764 + $0x198] sm:$0xff]
  %v817 = vld [vmem:[%s764 + $0x1a0] sm:$0xff]
  %v818 = vld [vmem:[%s764 + $0x1a8] sm:$0xff]
  %v819 = vld [vmem:[%s764 + $0x1b0] sm:$0xff]
  %v820 = vld [vmem:[%s764 + $0x1b8] sm:$0xff]
  %v821 = vld [vmem:[%s764 + $0x1c0] sm:$0xff]
  %v822 = vld [vmem:[%s764 + $0x1c8] sm:$0xff]
  %v823 = vld [vmem:[%s764 + $0x1d0] sm:$0xff]
  %v824 = vld [vmem:[%s764 + $0x1d8] sm:$0xff]
  %v825 = vld [vmem:[%s764 + $0x1e0] sm:$0xff]
  %v826 = vld [vmem:[%s764 + $0x1e8] sm:$0xff]
  %v827 = vld [vmem:[%s764 + $0x1f0] sm:$0xff]
  %v828 = vld [vmem:[%s764 + $0x1f8] sm:$0xff]
  %s829 = scalar_lea.vmem %s1, 4
  %v830 = vld [vmem:[%s829] sm:$0x1]
  %v832 = vlaneseq
  %v833 = vshrl.u32 %v832, 7
  %v834 = vsub.s32 0, %v833
  %v835 = vrot.slane %v830, %v834
  %v837 = vmul.f32 %v765, %v835
  %v838 = vmul.f32 %v766, %v835
  %v839 = vmul.f32 %v767, %v835
  %v840 = vmul.f32 %v768, %v835
  %v841 = vmul.f32 %v769, %v835
  %v842 = vmul.f32 %v770, %v835
  %v843 = vmul.f32 %v771, %v835
  %v844 = vmul.f32 %v772, %v835
  %v845 = vmul.f32 %v773, %v835
  %v846 = vmul.f32 %v774, %v835
  %v847 = vmul.f32 %v775, %v835
  %v848 = vmul.f32 %v776, %v835
  %v849 = vmul.f32 %v777, %v835
  %v850 = vmul.f32 %v778, %v835
  %v851 = vmul.f32 %v779, %v835
  %v852 = vmul.f32 %v780, %v835
  %v853 = vmul.f32 %v781, %v835
  %v854 = vmul.f32 %v782, %v835
  %v855 = vmul.f32 %v783, %v835
  %v856 = vmul.f32 %v784, %v835
  %v857 = vmul.f32 %v785, %v835
  %v858 = vmul.f32 %v786, %v835
  %v859 = vmul.f32 %v787, %v835
  %v860 = vmul.f32 %v788, %v835
  %v861 = vmul.f32 %v789, %v835
  %v862 = vmul.f32 %v790, %v835
  %v863 = vmul.f32 %v791, %v835
  %v864 = vmul.f32 %v792, %v835
  %v865 = vmul.f32 %v793, %v835
  %v866 = vmul.f32 %v794, %v835
  %v867 = vmul.f32 %v795, %v835
  %v868 = vmul.f32 %v796, %v835
  %v869 = vmul.f32 %v797, %v835
  %v870 = vmul.f32 %v798, %v835
  %v871 = vmul.f32 %v799, %v835
  %v872 = vmul.f32 %v800, %v835
  %v873 = vmul.f32 %v801, %v835
  %v874 = vmul.f32 %v802, %v835
  %v875 = vmul.f32 %v803, %v835
  %v876 = vmul.f32 %v804, %v835
  %v877 = vmul.f32 %v805, %v835
  %v878 = vmul.f32 %v806, %v835
  %v879 = vmul.f32 %v807, %v835
  %v880 = vmul.f32 %v808, %v835
  %v881 = vmul.f32 %v809, %v835
  %v882 = vmul.f32 %v810, %v835
  %v883 = vmul.f32 %v811, %v835
  %v884 = vmul.f32 %v812, %v835
  %v885 = vmul.f32 %v813, %v835
  %v886 = vmul.f32 %v814, %v835
  %v887 = vmul.f32 %v815, %v835
  %v888 = vmul.f32 %v816, %v835
  %v889 = vmul.f32 %v817, %v835
  %v890 = vmul.f32 %v818, %v835
  %v891 = vmul.f32 %v819, %v835
  %v892 = vmul.f32 %v820, %v835
  %v893 = vmul.f32 %v821, %v835
  %v894 = vmul.f32 %v822, %v835
  %v895 = vmul.f32 %v823, %v835
  %v896 = vmul.f32 %v824, %v835
  %v897 = vmul.f32 %v825, %v835
  %v898 = vmul.f32 %v826, %v835
  %v899 = vmul.f32 %v827, %v835
  %v900 = vmul.f32 %v828, %v835
  %v901 = vadd.f32 %v700, %v837
  %v902 = vadd.f32 %v701, %v838
  %v903 = vadd.f32 %v702, %v839
  %v904 = vadd.f32 %v703, %v840
  %v905 = vadd.f32 %v704, %v841
  %v906 = vadd.f32 %v705, %v842
  %v907 = vadd.f32 %v706, %v843
  %v908 = vadd.f32 %v707, %v844
  %v909 = vadd.f32 %v708, %v845
  %v910 = vadd.f32 %v709, %v846
  %v911 = vadd.f32 %v710, %v847
  %v912 = vadd.f32 %v711, %v848
  %v913 = vadd.f32 %v712, %v849
  %v914 = vadd.f32 %v713, %v850
  %v915 = vadd.f32 %v714, %v851
  %v916 = vadd.f32 %v715, %v852
  %v917 = vadd.f32 %v716, %v853
  %v918 = vadd.f32 %v717, %v854
  %v919 = vadd.f32 %v718, %v855
  %v920 = vadd.f32 %v719, %v856
  %v921 = vadd.f32 %v720, %v857
  %v922 = vadd.f32 %v721, %v858
  %v923 = vadd.f32 %v722, %v859
  %v924 = vadd.f32 %v723, %v860
  %v925 = vadd.f32 %v724, %v861
  %v926 = vadd.f32 %v725, %v862
  %v927 = vadd.f32 %v726, %v863
  %v928 = vadd.f32 %v727, %v864
  %v929 = vadd.f32 %v728, %v865
  %v930 = vadd.f32 %v729, %v866
  %v931 = vadd.f32 %v730, %v867
  %v932 = vadd.f32 %v731, %v868
  %v933 = vadd.f32 %v732, %v869
  %v934 = vadd.f32 %v733, %v870
  %v935 = vadd.f32 %v734, %v871
  %v936 = vadd.f32 %v735, %v872
  %v937 = vadd.f32 %v736, %v873
  %v938 = vadd.f32 %v737, %v874
  %v939 = vadd.f32 %v738, %v875
  %v940 = vadd.f32 %v739, %v876
  %v941 = vadd.f32 %v740, %v877
  %v942 = vadd.f32 %v741, %v878
  %v943 = vadd.f32 %v742, %v879
  %v944 = vadd.f32 %v743, %v880
  %v945 = vadd.f32 %v744, %v881
  %v946 = vadd.f32 %v745, %v882
  %v947 = vadd.f32 %v746, %v883
  %v948 = vadd.f32 %v747, %v884
  %v949 = vadd.f32 %v748, %v885
  %v950 = vadd.f32 %v749, %v886
  %v951 = vadd.f32 %v750, %v887
  %v952 = vadd.f32 %v751, %v888
  %v953 = vadd.f32 %v752, %v889
  %v954 = vadd.f32 %v753, %v890
  %v955 = vadd.f32 %v754, %v891
  %v956 = vadd.f32 %v755, %v892
  %v957 = vadd.f32 %v756, %v893
  %v958 = vadd.f32 %v757, %v894
  %v959 = vadd.f32 %v758, %v895
  %v960 = vadd.f32 %v759, %v896
  %v961 = vadd.f32 %v760, %v897
  %v962 = vadd.f32 %v761, %v898
  %v963 = vadd.f32 %v762, %v899
  %v964 = vadd.f32 %v763, %v900
  %s965 = scalar_lea.vmem %s0, 2560
  %v966 = vld [vmem:[%s965] sm:$0xff]
  %v967 = vld [vmem:[%s965 + $0x8] sm:$0xff]
  %v968 = vld [vmem:[%s965 + $0x10] sm:$0xff]
  %v969 = vld [vmem:[%s965 + $0x18] sm:$0xff]
  %v970 = vld [vmem:[%s965 + $0x20] sm:$0xff]
  %v971 = vld [vmem:[%s965 + $0x28] sm:$0xff]
  %v972 = vld [vmem:[%s965 + $0x30] sm:$0xff]
  %v973 = vld [vmem:[%s965 + $0x38] sm:$0xff]
  %v974 = vld [vmem:[%s965 + $0x40] sm:$0xff]
  %v975 = vld [vmem:[%s965 + $0x48] sm:$0xff]
  %v976 = vld [vmem:[%s965 + $0x50] sm:$0xff]
  %v977 = vld [vmem:[%s965 + $0x58] sm:$0xff]
  %v978 = vld [vmem:[%s965 + $0x60] sm:$0xff]
  %v979 = vld [vmem:[%s965 + $0x68] sm:$0xff]
  %v980 = vld [vmem:[%s965 + $0x70] sm:$0xff]
  %v981 = vld [vmem:[%s965 + $0x78] sm:$0xff]
  %v982 = vld [vmem:[%s965 + $0x80] sm:$0xff]
  %v983 = vld [vmem:[%s965 + $0x88] sm:$0xff]
  %v984 = vld [vmem:[%s965 + $0x90] sm:$0xff]
  %v985 = vld [vmem:[%s965 + $0x98] sm:$0xff]
  %v986 = vld [vmem:[%s965 + $0xa0] sm:$0xff]
  %v987 = vld [vmem:[%s965 + $0xa8] sm:$0xff]
  %v988 = vld [vmem:[%s965 + $0xb0] sm:$0xff]
  %v989 = vld [vmem:[%s965 + $0xb8] sm:$0xff]
  %v990 = vld [vmem:[%s965 + $0xc0] sm:$0xff]
  %v991 = vld [vmem:[%s965 + $0xc8] sm:$0xff]
  %v992 = vld [vmem:[%s965 + $0xd0] sm:$0xff]
  %v993 = vld [vmem:[%s965 + $0xd8] sm:$0xff]
  %v994 = vld [vmem:[%s965 + $0xe0] sm:$0xff]
  %v995 = vld [vmem:[%s965 + $0xe8] sm:$0xff]
  %v996 = vld [vmem:[%s965 + $0xf0] sm:$0xff]
  %v997 = vld [vmem:[%s965 + $0xf8] sm:$0xff]
  %v998 = vld [vmem:[%s965 + $0x100] sm:$0xff]
  %v999 = vld [vmem:[%s965 + $0x108] sm:$0xff]
  %v1000 = vld [vmem:[%s965 + $0x110] sm:$0xff]
  %v1001 = vld [vmem:[%s965 + $0x118] sm:$0xff]
  %v1002 = vld [vmem:[%s965 + $0x120] sm:$0xff]
  %v1003 = vld [vmem:[%s965 + $0x128] sm:$0xff]
  %v1004 = vld [vmem:[%s965 + $0x130] sm:$0xff]
  %v1005 = vld [vmem:[%s965 + $0x138] sm:$0xff]
  %v1006 = vld [vmem:[%s965 + $0x140] sm:$0xff]
  %v1007 = vld [vmem:[%s965 + $0x148] sm:$0xff]
  %v1008 = vld [vmem:[%s965 + $0x150] sm:$0xff]
  %v1009 = vld [vmem:[%s965 + $0x158] sm:$0xff]
  %v1010 = vld [vmem:[%s965 + $0x160] sm:$0xff]
  %v1011 = vld [vmem:[%s965 + $0x168] sm:$0xff]
  %v1012 = vld [vmem:[%s965 + $0x170] sm:$0xff]
  %v1013 = vld [vmem:[%s965 + $0x178] sm:$0xff]
  %v1014 = vld [vmem:[%s965 + $0x180] sm:$0xff]
  %v1015 = vld [vmem:[%s965 + $0x188] sm:$0xff]
  %v1016 = vld [vmem:[%s965 + $0x190] sm:$0xff]
  %v1017 = vld [vmem:[%s965 + $0x198] sm:$0xff]
  %v1018 = vld [vmem:[%s965 + $0x1a0] sm:$0xff]
  %v1019 = vld [vmem:[%s965 + $0x1a8] sm:$0xff]
  %v1020 = vld [vmem:[%s965 + $0x1b0] sm:$0xff]
  %v1021 = vld [vmem:[%s965 + $0x1b8] sm:$0xff]
  %v1022 = vld [vmem:[%s965 + $0x1c0] sm:$0xff]
  %v1023 = vld [vmem:[%s965 + $0x1c8] sm:$0xff]
  %v1024 = vld [vmem:[%s965 + $0x1d0] sm:$0xff]
  %v1025 = vld [vmem:[%s965 + $0x1d8] sm:$0xff]
  %v1026 = vld [vmem:[%s965 + $0x1e0] sm:$0xff]
  %v1027 = vld [vmem:[%s965 + $0x1e8] sm:$0xff]
  %v1028 = vld [vmem:[%s965 + $0x1f0] sm:$0xff]
  %v1029 = vld [vmem:[%s965 + $0x1f8] sm:$0xff]
  %s1030 = scalar_lea.vmem %s1, 5
  %v1031 = vld [vmem:[%s1030] sm:$0x1]
  %v1033 = vlaneseq
  %v1034 = vshrl.u32 %v1033, 7
  %v1035 = vsub.s32 0, %v1034
  %v1036 = vrot.slane %v1031, %v1035
  %v1038 = vmul.f32 %v966, %v1036
  %v1039 = vmul.f32 %v967, %v1036
  %v1040 = vmul.f32 %v968, %v1036
  %v1041 = vmul.f32 %v969, %v1036
  %v1042 = vmul.f32 %v970, %v1036
  %v1043 = vmul.f32 %v971, %v1036
  %v1044 = vmul.f32 %v972, %v1036
  %v1045 = vmul.f32 %v973, %v1036
  %v1046 = vmul.f32 %v974, %v1036
  %v1047 = vmul.f32 %v975, %v1036
  %v1048 = vmul.f32 %v976, %v1036
  %v1049 = vmul.f32 %v977, %v1036
  %v1050 = vmul.f32 %v978, %v1036
  %v1051 = vmul.f32 %v979, %v1036
  %v1052 = vmul.f32 %v980, %v1036
  %v1053 = vmul.f32 %v981, %v1036
  %v1054 = vmul.f32 %v982, %v1036
  %v1055 = vmul.f32 %v983, %v1036
  %v1056 = vmul.f32 %v984, %v1036
  %v1057 = vmul.f32 %v985, %v1036
  %v1058 = vmul.f32 %v986, %v1036
  %v1059 = vmul.f32 %v987, %v1036
  %v1060 = vmul.f32 %v988, %v1036
  %v1061 = vmul.f32 %v989, %v1036
  %v1062 = vmul.f32 %v990, %v1036
  %v1063 = vmul.f32 %v991, %v1036
  %v1064 = vmul.f32 %v992, %v1036
  %v1065 = vmul.f32 %v993, %v1036
  %v1066 = vmul.f32 %v994, %v1036
  %v1067 = vmul.f32 %v995, %v1036
  %v1068 = vmul.f32 %v996, %v1036
  %v1069 = vmul.f32 %v997, %v1036
  %v1070 = vmul.f32 %v998, %v1036
  %v1071 = vmul.f32 %v999, %v1036
  %v1072 = vmul.f32 %v1000, %v1036
  %v1073 = vmul.f32 %v1001, %v1036
  %v1074 = vmul.f32 %v1002, %v1036
  %v1075 = vmul.f32 %v1003, %v1036
  %v1076 = vmul.f32 %v1004, %v1036
  %v1077 = vmul.f32 %v1005, %v1036
  %v1078 = vmul.f32 %v1006, %v1036
  %v1079 = vmul.f32 %v1007, %v1036
  %v1080 = vmul.f32 %v1008, %v1036
  %v1081 = vmul.f32 %v1009, %v1036
  %v1082 = vmul.f32 %v1010, %v1036
  %v1083 = vmul.f32 %v1011, %v1036
  %v1084 = vmul.f32 %v1012, %v1036
  %v1085 = vmul.f32 %v1013, %v1036
  %v1086 = vmul.f32 %v1014, %v1036
  %v1087 = vmul.f32 %v1015, %v1036
  %v1088 = vmul.f32 %v1016, %v1036
  %v1089 = vmul.f32 %v1017, %v1036
  %v1090 = vmul.f32 %v1018, %v1036
  %v1091 = vmul.f32 %v1019, %v1036
  %v1092 = vmul.f32 %v1020, %v1036
  %v1093 = vmul.f32 %v1021, %v1036
  %v1094 = vmul.f32 %v1022, %v1036
  %v1095 = vmul.f32 %v1023, %v1036
  %v1096 = vmul.f32 %v1024, %v1036
  %v1097 = vmul.f32 %v1025, %v1036
  %v1098 = vmul.f32 %v1026, %v1036
  %v1099 = vmul.f32 %v1027, %v1036
  %v1100 = vmul.f32 %v1028, %v1036
  %v1101 = vmul.f32 %v1029, %v1036
  %v1102 = vadd.f32 %v901, %v1038
  %v1103 = vadd.f32 %v902, %v1039
  %v1104 = vadd.f32 %v903, %v1040
  %v1105 = vadd.f32 %v904, %v1041
  %v1106 = vadd.f32 %v905, %v1042
  %v1107 = vadd.f32 %v906, %v1043
  %v1108 = vadd.f32 %v907, %v1044
  %v1109 = vadd.f32 %v908, %v1045
  %v1110 = vadd.f32 %v909, %v1046
  %v1111 = vadd.f32 %v910, %v1047
  %v1112 = vadd.f32 %v911, %v1048
  %v1113 = vadd.f32 %v912, %v1049
  %v1114 = vadd.f32 %v913, %v1050
  %v1115 = vadd.f32 %v914, %v1051
  %v1116 = vadd.f32 %v915, %v1052
  %v1117 = vadd.f32 %v916, %v1053
  %v1118 = vadd.f32 %v917, %v1054
  %v1119 = vadd.f32 %v918, %v1055
  %v1120 = vadd.f32 %v919, %v1056
  %v1121 = vadd.f32 %v920, %v1057
  %v1122 = vadd.f32 %v921, %v1058
  %v1123 = vadd.f32 %v922, %v1059
  %v1124 = vadd.f32 %v923, %v1060
  %v1125 = vadd.f32 %v924, %v1061
  %v1126 = vadd.f32 %v925, %v1062
  %v1127 = vadd.f32 %v926, %v1063
  %v1128 = vadd.f32 %v927, %v1064
  %v1129 = vadd.f32 %v928, %v1065
  %v1130 = vadd.f32 %v929, %v1066
  %v1131 = vadd.f32 %v930, %v1067
  %v1132 = vadd.f32 %v931, %v1068
  %v1133 = vadd.f32 %v932, %v1069
  %v1134 = vadd.f32 %v933, %v1070
  %v1135 = vadd.f32 %v934, %v1071
  %v1136 = vadd.f32 %v935, %v1072
  %v1137 = vadd.f32 %v936, %v1073
  %v1138 = vadd.f32 %v937, %v1074
  %v1139 = vadd.f32 %v938, %v1075
  %v1140 = vadd.f32 %v939, %v1076
  %v1141 = vadd.f32 %v940, %v1077
  %v1142 = vadd.f32 %v941, %v1078
  %v1143 = vadd.f32 %v942, %v1079
  %v1144 = vadd.f32 %v943, %v1080
  %v1145 = vadd.f32 %v944, %v1081
  %v1146 = vadd.f32 %v945, %v1082
  %v1147 = vadd.f32 %v946, %v1083
  %v1148 = vadd.f32 %v947, %v1084
  %v1149 = vadd.f32 %v948, %v1085
  %v1150 = vadd.f32 %v949, %v1086
  %v1151 = vadd.f32 %v950, %v1087
  %v1152 = vadd.f32 %v951, %v1088
  %v1153 = vadd.f32 %v952, %v1089
  %v1154 = vadd.f32 %v953, %v1090
  %v1155 = vadd.f32 %v954, %v1091
  %v1156 = vadd.f32 %v955, %v1092
  %v1157 = vadd.f32 %v956, %v1093
  %v1158 = vadd.f32 %v957, %v1094
  %v1159 = vadd.f32 %v958, %v1095
  %v1160 = vadd.f32 %v959, %v1096
  %v1161 = vadd.f32 %v960, %v1097
  %v1162 = vadd.f32 %v961, %v1098
  %v1163 = vadd.f32 %v962, %v1099
  %v1164 = vadd.f32 %v963, %v1100
  %v1165 = vadd.f32 %v964, %v1101
  %s1166 = scalar_lea.vmem %s0, 3072
  %v1167 = vld [vmem:[%s1166] sm:$0xff]
  %v1168 = vld [vmem:[%s1166 + $0x8] sm:$0xff]
  %v1169 = vld [vmem:[%s1166 + $0x10] sm:$0xff]
  %v1170 = vld [vmem:[%s1166 + $0x18] sm:$0xff]
  %v1171 = vld [vmem:[%s1166 + $0x20] sm:$0xff]
  %v1172 = vld [vmem:[%s1166 + $0x28] sm:$0xff]
  %v1173 = vld [vmem:[%s1166 + $0x30] sm:$0xff]
  %v1174 = vld [vmem:[%s1166 + $0x38] sm:$0xff]
  %v1175 = vld [vmem:[%s1166 + $0x40] sm:$0xff]
  %v1176 = vld [vmem:[%s1166 + $0x48] sm:$0xff]
  %v1177 = vld [vmem:[%s1166 + $0x50] sm:$0xff]
  %v1178 = vld [vmem:[%s1166 + $0x58] sm:$0xff]
  %v1179 = vld [vmem:[%s1166 + $0x60] sm:$0xff]
  %v1180 = vld [vmem:[%s1166 + $0x68] sm:$0xff]
  %v1181 = vld [vmem:[%s1166 + $0x70] sm:$0xff]
  %v1182 = vld [vmem:[%s1166 + $0x78] sm:$0xff]
  %v1183 = vld [vmem:[%s1166 + $0x80] sm:$0xff]
  %v1184 = vld [vmem:[%s1166 + $0x88] sm:$0xff]
  %v1185 = vld [vmem:[%s1166 + $0x90] sm:$0xff]
  %v1186 = vld [vmem:[%s1166 + $0x98] sm:$0xff]
  %v1187 = vld [vmem:[%s1166 + $0xa0] sm:$0xff]
  %v1188 = vld [vmem:[%s1166 + $0xa8] sm:$0xff]
  %v1189 = vld [vmem:[%s1166 + $0xb0] sm:$0xff]
  %v1190 = vld [vmem:[%s1166 + $0xb8] sm:$0xff]
  %v1191 = vld [vmem:[%s1166 + $0xc0] sm:$0xff]
  %v1192 = vld [vmem:[%s1166 + $0xc8] sm:$0xff]
  %v1193 = vld [vmem:[%s1166 + $0xd0] sm:$0xff]
  %v1194 = vld [vmem:[%s1166 + $0xd8] sm:$0xff]
  %v1195 = vld [vmem:[%s1166 + $0xe0] sm:$0xff]
  %v1196 = vld [vmem:[%s1166 + $0xe8] sm:$0xff]
  %v1197 = vld [vmem:[%s1166 + $0xf0] sm:$0xff]
  %v1198 = vld [vmem:[%s1166 + $0xf8] sm:$0xff]
  %v1199 = vld [vmem:[%s1166 + $0x100] sm:$0xff]
  %v1200 = vld [vmem:[%s1166 + $0x108] sm:$0xff]
  %v1201 = vld [vmem:[%s1166 + $0x110] sm:$0xff]
  %v1202 = vld [vmem:[%s1166 + $0x118] sm:$0xff]
  %v1203 = vld [vmem:[%s1166 + $0x120] sm:$0xff]
  %v1204 = vld [vmem:[%s1166 + $0x128] sm:$0xff]
  %v1205 = vld [vmem:[%s1166 + $0x130] sm:$0xff]
  %v1206 = vld [vmem:[%s1166 + $0x138] sm:$0xff]
  %v1207 = vld [vmem:[%s1166 + $0x140] sm:$0xff]
  %v1208 = vld [vmem:[%s1166 + $0x148] sm:$0xff]
  %v1209 = vld [vmem:[%s1166 + $0x150] sm:$0xff]
  %v1210 = vld [vmem:[%s1166 + $0x158] sm:$0xff]
  %v1211 = vld [vmem:[%s1166 + $0x160] sm:$0xff]
  %v1212 = vld [vmem:[%s1166 + $0x168] sm:$0xff]
  %v1213 = vld [vmem:[%s1166 + $0x170] sm:$0xff]
  %v1214 = vld [vmem:[%s1166 + $0x178] sm:$0xff]
  %v1215 = vld [vmem:[%s1166 + $0x180] sm:$0xff]
  %v1216 = vld [vmem:[%s1166 + $0x188] sm:$0xff]
  %v1217 = vld [vmem:[%s1166 + $0x190] sm:$0xff]
  %v1218 = vld [vmem:[%s1166 + $0x198] sm:$0xff]
  %v1219 = vld [vmem:[%s1166 + $0x1a0] sm:$0xff]
  %v1220 = vld [vmem:[%s1166 + $0x1a8] sm:$0xff]
  %v1221 = vld [vmem:[%s1166 + $0x1b0] sm:$0xff]
  %v1222 = vld [vmem:[%s1166 + $0x1b8] sm:$0xff]
  %v1223 = vld [vmem:[%s1166 + $0x1c0] sm:$0xff]
  %v1224 = vld [vmem:[%s1166 + $0x1c8] sm:$0xff]
  %v1225 = vld [vmem:[%s1166 + $0x1d0] sm:$0xff]
  %v1226 = vld [vmem:[%s1166 + $0x1d8] sm:$0xff]
  %v1227 = vld [vmem:[%s1166 + $0x1e0] sm:$0xff]
  %v1228 = vld [vmem:[%s1166 + $0x1e8] sm:$0xff]
  %v1229 = vld [vmem:[%s1166 + $0x1f0] sm:$0xff]
  %v1230 = vld [vmem:[%s1166 + $0x1f8] sm:$0xff]
  %s1231 = scalar_lea.vmem %s1, 6
  %v1232 = vld [vmem:[%s1231] sm:$0x1]
  %v1234 = vlaneseq
  %v1235 = vshrl.u32 %v1234, 7
  %v1236 = vsub.s32 0, %v1235
  %v1237 = vrot.slane %v1232, %v1236
  %v1239 = vmul.f32 %v1167, %v1237
  %v1240 = vmul.f32 %v1168, %v1237
  %v1241 = vmul.f32 %v1169, %v1237
  %v1242 = vmul.f32 %v1170, %v1237
  %v1243 = vmul.f32 %v1171, %v1237
  %v1244 = vmul.f32 %v1172, %v1237
  %v1245 = vmul.f32 %v1173, %v1237
  %v1246 = vmul.f32 %v1174, %v1237
  %v1247 = vmul.f32 %v1175, %v1237
  %v1248 = vmul.f32 %v1176, %v1237
  %v1249 = vmul.f32 %v1177, %v1237
  %v1250 = vmul.f32 %v1178, %v1237
  %v1251 = vmul.f32 %v1179, %v1237
  %v1252 = vmul.f32 %v1180, %v1237
  %v1253 = vmul.f32 %v1181, %v1237
  %v1254 = vmul.f32 %v1182, %v1237
  %v1255 = vmul.f32 %v1183, %v1237
  %v1256 = vmul.f32 %v1184, %v1237
  %v1257 = vmul.f32 %v1185, %v1237
  %v1258 = vmul.f32 %v1186, %v1237
  %v1259 = vmul.f32 %v1187, %v1237
  %v1260 = vmul.f32 %v1188, %v1237
  %v1261 = vmul.f32 %v1189, %v1237
  %v1262 = vmul.f32 %v1190, %v1237
  %v1263 = vmul.f32 %v1191, %v1237
  %v1264 = vmul.f32 %v1192, %v1237
  %v1265 = vmul.f32 %v1193, %v1237
  %v1266 = vmul.f32 %v1194, %v1237
  %v1267 = vmul.f32 %v1195, %v1237
  %v1268 = vmul.f32 %v1196, %v1237
  %v1269 = vmul.f32 %v1197, %v1237
  %v1270 = vmul.f32 %v1198, %v1237
  %v1271 = vmul.f32 %v1199, %v1237
  %v1272 = vmul.f32 %v1200, %v1237
  %v1273 = vmul.f32 %v1201, %v1237
  %v1274 = vmul.f32 %v1202, %v1237
  %v1275 = vmul.f32 %v1203, %v1237
  %v1276 = vmul.f32 %v1204, %v1237
  %v1277 = vmul.f32 %v1205, %v1237
  %v1278 = vmul.f32 %v1206, %v1237
  %v1279 = vmul.f32 %v1207, %v1237
  %v1280 = vmul.f32 %v1208, %v1237
  %v1281 = vmul.f32 %v1209, %v1237
  %v1282 = vmul.f32 %v1210, %v1237
  %v1283 = vmul.f32 %v1211, %v1237
  %v1284 = vmul.f32 %v1212, %v1237
  %v1285 = vmul.f32 %v1213, %v1237
  %v1286 = vmul.f32 %v1214, %v1237
  %v1287 = vmul.f32 %v1215, %v1237
  %v1288 = vmul.f32 %v1216, %v1237
  %v1289 = vmul.f32 %v1217, %v1237
  %v1290 = vmul.f32 %v1218, %v1237
  %v1291 = vmul.f32 %v1219, %v1237
  %v1292 = vmul.f32 %v1220, %v1237
  %v1293 = vmul.f32 %v1221, %v1237
  %v1294 = vmul.f32 %v1222, %v1237
  %v1295 = vmul.f32 %v1223, %v1237
  %v1296 = vmul.f32 %v1224, %v1237
  %v1297 = vmul.f32 %v1225, %v1237
  %v1298 = vmul.f32 %v1226, %v1237
  %v1299 = vmul.f32 %v1227, %v1237
  %v1300 = vmul.f32 %v1228, %v1237
  %v1301 = vmul.f32 %v1229, %v1237
  %v1302 = vmul.f32 %v1230, %v1237
  %v1303 = vadd.f32 %v1102, %v1239
  %v1304 = vadd.f32 %v1103, %v1240
  %v1305 = vadd.f32 %v1104, %v1241
  %v1306 = vadd.f32 %v1105, %v1242
  %v1307 = vadd.f32 %v1106, %v1243
  %v1308 = vadd.f32 %v1107, %v1244
  %v1309 = vadd.f32 %v1108, %v1245
  %v1310 = vadd.f32 %v1109, %v1246
  %v1311 = vadd.f32 %v1110, %v1247
  %v1312 = vadd.f32 %v1111, %v1248
  %v1313 = vadd.f32 %v1112, %v1249
  %v1314 = vadd.f32 %v1113, %v1250
  %v1315 = vadd.f32 %v1114, %v1251
  %v1316 = vadd.f32 %v1115, %v1252
  %v1317 = vadd.f32 %v1116, %v1253
  %v1318 = vadd.f32 %v1117, %v1254
  %v1319 = vadd.f32 %v1118, %v1255
  %v1320 = vadd.f32 %v1119, %v1256
  %v1321 = vadd.f32 %v1120, %v1257
  %v1322 = vadd.f32 %v1121, %v1258
  %v1323 = vadd.f32 %v1122, %v1259
  %v1324 = vadd.f32 %v1123, %v1260
  %v1325 = vadd.f32 %v1124, %v1261
  %v1326 = vadd.f32 %v1125, %v1262
  %v1327 = vadd.f32 %v1126, %v1263
  %v1328 = vadd.f32 %v1127, %v1264
  %v1329 = vadd.f32 %v1128, %v1265
  %v1330 = vadd.f32 %v1129, %v1266
  %v1331 = vadd.f32 %v1130, %v1267
  %v1332 = vadd.f32 %v1131, %v1268
  %v1333 = vadd.f32 %v1132, %v1269
  %v1334 = vadd.f32 %v1133, %v1270
  %v1335 = vadd.f32 %v1134, %v1271
  %v1336 = vadd.f32 %v1135, %v1272
  %v1337 = vadd.f32 %v1136, %v1273
  %v1338 = vadd.f32 %v1137, %v1274
  %v1339 = vadd.f32 %v1138, %v1275
  %v1340 = vadd.f32 %v1139, %v1276
  %v1341 = vadd.f32 %v1140, %v1277
  %v1342 = vadd.f32 %v1141, %v1278
  %v1343 = vadd.f32 %v1142, %v1279
  %v1344 = vadd.f32 %v1143, %v1280
  %v1345 = vadd.f32 %v1144, %v1281
  %v1346 = vadd.f32 %v1145, %v1282
  %v1347 = vadd.f32 %v1146, %v1283
  %v1348 = vadd.f32 %v1147, %v1284
  %v1349 = vadd.f32 %v1148, %v1285
  %v1350 = vadd.f32 %v1149, %v1286
  %v1351 = vadd.f32 %v1150, %v1287
  %v1352 = vadd.f32 %v1151, %v1288
  %v1353 = vadd.f32 %v1152, %v1289
  %v1354 = vadd.f32 %v1153, %v1290
  %v1355 = vadd.f32 %v1154, %v1291
  %v1356 = vadd.f32 %v1155, %v1292
  %v1357 = vadd.f32 %v1156, %v1293
  %v1358 = vadd.f32 %v1157, %v1294
  %v1359 = vadd.f32 %v1158, %v1295
  %v1360 = vadd.f32 %v1159, %v1296
  %v1361 = vadd.f32 %v1160, %v1297
  %v1362 = vadd.f32 %v1161, %v1298
  %v1363 = vadd.f32 %v1162, %v1299
  %v1364 = vadd.f32 %v1163, %v1300
  %v1365 = vadd.f32 %v1164, %v1301
  %v1366 = vadd.f32 %v1165, %v1302
  %s1367 = scalar_lea.vmem %s0, 3584
  %v1368 = vld [vmem:[%s1367] sm:$0xff]
  %v1369 = vld [vmem:[%s1367 + $0x8] sm:$0xff]
  %v1370 = vld [vmem:[%s1367 + $0x10] sm:$0xff]
  %v1371 = vld [vmem:[%s1367 + $0x18] sm:$0xff]
  %v1372 = vld [vmem:[%s1367 + $0x20] sm:$0xff]
  %v1373 = vld [vmem:[%s1367 + $0x28] sm:$0xff]
  %v1374 = vld [vmem:[%s1367 + $0x30] sm:$0xff]
  %v1375 = vld [vmem:[%s1367 + $0x38] sm:$0xff]
  %v1376 = vld [vmem:[%s1367 + $0x40] sm:$0xff]
  %v1377 = vld [vmem:[%s1367 + $0x48] sm:$0xff]
  %v1378 = vld [vmem:[%s1367 + $0x50] sm:$0xff]
  %v1379 = vld [vmem:[%s1367 + $0x58] sm:$0xff]
  %v1380 = vld [vmem:[%s1367 + $0x60] sm:$0xff]
  %v1381 = vld [vmem:[%s1367 + $0x68] sm:$0xff]
  %v1382 = vld [vmem:[%s1367 + $0x70] sm:$0xff]
  %v1383 = vld [vmem:[%s1367 + $0x78] sm:$0xff]
  %v1384 = vld [vmem:[%s1367 + $0x80] sm:$0xff]
  %v1385 = vld [vmem:[%s1367 + $0x88] sm:$0xff]
  %v1386 = vld [vmem:[%s1367 + $0x90] sm:$0xff]
  %v1387 = vld [vmem:[%s1367 + $0x98] sm:$0xff]
  %v1388 = vld [vmem:[%s1367 + $0xa0] sm:$0xff]
  %v1389 = vld [vmem:[%s1367 + $0xa8] sm:$0xff]
  %v1390 = vld [vmem:[%s1367 + $0xb0] sm:$0xff]
  %v1391 = vld [vmem:[%s1367 + $0xb8] sm:$0xff]
  %v1392 = vld [vmem:[%s1367 + $0xc0] sm:$0xff]
  %v1393 = vld [vmem:[%s1367 + $0xc8] sm:$0xff]
  %v1394 = vld [vmem:[%s1367 + $0xd0] sm:$0xff]
  %v1395 = vld [vmem:[%s1367 + $0xd8] sm:$0xff]
  %v1396 = vld [vmem:[%s1367 + $0xe0] sm:$0xff]
  %v1397 = vld [vmem:[%s1367 + $0xe8] sm:$0xff]
  %v1398 = vld [vmem:[%s1367 + $0xf0] sm:$0xff]
  %v1399 = vld [vmem:[%s1367 + $0xf8] sm:$0xff]
  %v1400 = vld [vmem:[%s1367 + $0x100] sm:$0xff]
  %v1401 = vld [vmem:[%s1367 + $0x108] sm:$0xff]
  %v1402 = vld [vmem:[%s1367 + $0x110] sm:$0xff]
  %v1403 = vld [vmem:[%s1367 + $0x118] sm:$0xff]
  %v1404 = vld [vmem:[%s1367 + $0x120] sm:$0xff]
  %v1405 = vld [vmem:[%s1367 + $0x128] sm:$0xff]
  %v1406 = vld [vmem:[%s1367 + $0x130] sm:$0xff]
  %v1407 = vld [vmem:[%s1367 + $0x138] sm:$0xff]
  %v1408 = vld [vmem:[%s1367 + $0x140] sm:$0xff]
  %v1409 = vld [vmem:[%s1367 + $0x148] sm:$0xff]
  %v1410 = vld [vmem:[%s1367 + $0x150] sm:$0xff]
  %v1411 = vld [vmem:[%s1367 + $0x158] sm:$0xff]
  %v1412 = vld [vmem:[%s1367 + $0x160] sm:$0xff]
  %v1413 = vld [vmem:[%s1367 + $0x168] sm:$0xff]
  %v1414 = vld [vmem:[%s1367 + $0x170] sm:$0xff]
  %v1415 = vld [vmem:[%s1367 + $0x178] sm:$0xff]
  %v1416 = vld [vmem:[%s1367 + $0x180] sm:$0xff]
  %v1417 = vld [vmem:[%s1367 + $0x188] sm:$0xff]
  %v1418 = vld [vmem:[%s1367 + $0x190] sm:$0xff]
  %v1419 = vld [vmem:[%s1367 + $0x198] sm:$0xff]
  %v1420 = vld [vmem:[%s1367 + $0x1a0] sm:$0xff]
  %v1421 = vld [vmem:[%s1367 + $0x1a8] sm:$0xff]
  %v1422 = vld [vmem:[%s1367 + $0x1b0] sm:$0xff]
  %v1423 = vld [vmem:[%s1367 + $0x1b8] sm:$0xff]
  %v1424 = vld [vmem:[%s1367 + $0x1c0] sm:$0xff]
  %v1425 = vld [vmem:[%s1367 + $0x1c8] sm:$0xff]
  %v1426 = vld [vmem:[%s1367 + $0x1d0] sm:$0xff]
  %v1427 = vld [vmem:[%s1367 + $0x1d8] sm:$0xff]
  %v1428 = vld [vmem:[%s1367 + $0x1e0] sm:$0xff]
  %v1429 = vld [vmem:[%s1367 + $0x1e8] sm:$0xff]
  %v1430 = vld [vmem:[%s1367 + $0x1f0] sm:$0xff]
  %v1431 = vld [vmem:[%s1367 + $0x1f8] sm:$0xff]
  %s1432 = scalar_lea.vmem %s1, 7
  %v1433 = vld [vmem:[%s1432] sm:$0x1]
  %v1435 = vlaneseq
  %v1436 = vshrl.u32 %v1435, 7
  %v1437 = vsub.s32 0, %v1436
  %v1438 = vrot.slane %v1433, %v1437
  %v1440 = vmul.f32 %v1368, %v1438
  %v1441 = vmul.f32 %v1369, %v1438
  %v1442 = vmul.f32 %v1370, %v1438
  %v1443 = vmul.f32 %v1371, %v1438
  %v1444 = vmul.f32 %v1372, %v1438
  %v1445 = vmul.f32 %v1373, %v1438
  %v1446 = vmul.f32 %v1374, %v1438
  %v1447 = vmul.f32 %v1375, %v1438
  %v1448 = vmul.f32 %v1376, %v1438
  %v1449 = vmul.f32 %v1377, %v1438
  %v1450 = vmul.f32 %v1378, %v1438
  %v1451 = vmul.f32 %v1379, %v1438
  %v1452 = vmul.f32 %v1380, %v1438
  %v1453 = vmul.f32 %v1381, %v1438
  %v1454 = vmul.f32 %v1382, %v1438
  %v1455 = vmul.f32 %v1383, %v1438
  %v1456 = vmul.f32 %v1384, %v1438
  %v1457 = vmul.f32 %v1385, %v1438
  %v1458 = vmul.f32 %v1386, %v1438
  %v1459 = vmul.f32 %v1387, %v1438
  %v1460 = vmul.f32 %v1388, %v1438
  %v1461 = vmul.f32 %v1389, %v1438
  %v1462 = vmul.f32 %v1390, %v1438
  %v1463 = vmul.f32 %v1391, %v1438
  %v1464 = vmul.f32 %v1392, %v1438
  %v1465 = vmul.f32 %v1393, %v1438
  %v1466 = vmul.f32 %v1394, %v1438
  %v1467 = vmul.f32 %v1395, %v1438
  %v1468 = vmul.f32 %v1396, %v1438
  %v1469 = vmul.f32 %v1397, %v1438
  %v1470 = vmul.f32 %v1398, %v1438
  %v1471 = vmul.f32 %v1399, %v1438
  %v1472 = vmul.f32 %v1400, %v1438
  %v1473 = vmul.f32 %v1401, %v1438
  %v1474 = vmul.f32 %v1402, %v1438
  %v1475 = vmul.f32 %v1403, %v1438
  %v1476 = vmul.f32 %v1404, %v1438
  %v1477 = vmul.f32 %v1405, %v1438
  %v1478 = vmul.f32 %v1406, %v1438
  %v1479 = vmul.f32 %v1407, %v1438
  %v1480 = vmul.f32 %v1408, %v1438
  %v1481 = vmul.f32 %v1409, %v1438
  %v1482 = vmul.f32 %v1410, %v1438
  %v1483 = vmul.f32 %v1411, %v1438
  %v1484 = vmul.f32 %v1412, %v1438
  %v1485 = vmul.f32 %v1413, %v1438
  %v1486 = vmul.f32 %v1414, %v1438
  %v1487 = vmul.f32 %v1415, %v1438
  %v1488 = vmul.f32 %v1416, %v1438
  %v1489 = vmul.f32 %v1417, %v1438
  %v1490 = vmul.f32 %v1418, %v1438
  %v1491 = vmul.f32 %v1419, %v1438
  %v1492 = vmul.f32 %v1420, %v1438
  %v1493 = vmul.f32 %v1421, %v1438
  %v1494 = vmul.f32 %v1422, %v1438
  %v1495 = vmul.f32 %v1423, %v1438
  %v1496 = vmul.f32 %v1424, %v1438
  %v1497 = vmul.f32 %v1425, %v1438
  %v1498 = vmul.f32 %v1426, %v1438
  %v1499 = vmul.f32 %v1427, %v1438
  %v1500 = vmul.f32 %v1428, %v1438
  %v1501 = vmul.f32 %v1429, %v1438
  %v1502 = vmul.f32 %v1430, %v1438
  %v1503 = vmul.f32 %v1431, %v1438
  %v1504 = vadd.f32 %v1303, %v1440
  %v1505 = vadd.f32 %v1304, %v1441
  %v1506 = vadd.f32 %v1305, %v1442
  %v1507 = vadd.f32 %v1306, %v1443
  %v1508 = vadd.f32 %v1307, %v1444
  %v1509 = vadd.f32 %v1308, %v1445
  %v1510 = vadd.f32 %v1309, %v1446
  %v1511 = vadd.f32 %v1310, %v1447
  %v1512 = vadd.f32 %v1311, %v1448
  %v1513 = vadd.f32 %v1312, %v1449
  %v1514 = vadd.f32 %v1313, %v1450
  %v1515 = vadd.f32 %v1314, %v1451
  %v1516 = vadd.f32 %v1315, %v1452
  %v1517 = vadd.f32 %v1316, %v1453
  %v1518 = vadd.f32 %v1317, %v1454
  %v1519 = vadd.f32 %v1318, %v1455
  %v1520 = vadd.f32 %v1319, %v1456
  %v1521 = vadd.f32 %v1320, %v1457
  %v1522 = vadd.f32 %v1321, %v1458
  %v1523 = vadd.f32 %v1322, %v1459
  %v1524 = vadd.f32 %v1323, %v1460
  %v1525 = vadd.f32 %v1324, %v1461
  %v1526 = vadd.f32 %v1325, %v1462
  %v1527 = vadd.f32 %v1326, %v1463
  %v1528 = vadd.f32 %v1327, %v1464
  %v1529 = vadd.f32 %v1328, %v1465
  %v1530 = vadd.f32 %v1329, %v1466
  %v1531 = vadd.f32 %v1330, %v1467
  %v1532 = vadd.f32 %v1331, %v1468
  %v1533 = vadd.f32 %v1332, %v1469
  %v1534 = vadd.f32 %v1333, %v1470
  %v1535 = vadd.f32 %v1334, %v1471
  %v1536 = vadd.f32 %v1335, %v1472
  %v1537 = vadd.f32 %v1336, %v1473
  %v1538 = vadd.f32 %v1337, %v1474
  %v1539 = vadd.f32 %v1338, %v1475
  %v1540 = vadd.f32 %v1339, %v1476
  %v1541 = vadd.f32 %v1340, %v1477
  %v1542 = vadd.f32 %v1341, %v1478
  %v1543 = vadd.f32 %v1342, %v1479
  %v1544 = vadd.f32 %v1343, %v1480
  %v1545 = vadd.f32 %v1344, %v1481
  %v1546 = vadd.f32 %v1345, %v1482
  %v1547 = vadd.f32 %v1346, %v1483
  %v1548 = vadd.f32 %v1347, %v1484
  %v1549 = vadd.f32 %v1348, %v1485
  %v1550 = vadd.f32 %v1349, %v1486
  %v1551 = vadd.f32 %v1350, %v1487
  %v1552 = vadd.f32 %v1351, %v1488
  %v1553 = vadd.f32 %v1352, %v1489
  %v1554 = vadd.f32 %v1353, %v1490
  %v1555 = vadd.f32 %v1354, %v1491
  %v1556 = vadd.f32 %v1355, %v1492
  %v1557 = vadd.f32 %v1356, %v1493
  %v1558 = vadd.f32 %v1357, %v1494
  %v1559 = vadd.f32 %v1358, %v1495
  %v1560 = vadd.f32 %v1359, %v1496
  %v1561 = vadd.f32 %v1360, %v1497
  %v1562 = vadd.f32 %v1361, %v1498
  %v1563 = vadd.f32 %v1362, %v1499
  %v1564 = vadd.f32 %v1363, %v1500
  %v1565 = vadd.f32 %v1364, %v1501
  %v1566 = vadd.f32 %v1365, %v1502
  %v1567 = vadd.f32 %v1366, %v1503
  %s1568 = scalar_lea.vmem %s0, 4096
  %v1569 = vld [vmem:[%s1568] sm:$0xff]
  %v1570 = vld [vmem:[%s1568 + $0x8] sm:$0xff]
  %v1571 = vld [vmem:[%s1568 + $0x10] sm:$0xff]
  %v1572 = vld [vmem:[%s1568 + $0x18] sm:$0xff]
  %v1573 = vld [vmem:[%s1568 + $0x20] sm:$0xff]
  %v1574 = vld [vmem:[%s1568 + $0x28] sm:$0xff]
  %v1575 = vld [vmem:[%s1568 + $0x30] sm:$0xff]
  %v1576 = vld [vmem:[%s1568 + $0x38] sm:$0xff]
  %v1577 = vld [vmem:[%s1568 + $0x40] sm:$0xff]
  %v1578 = vld [vmem:[%s1568 + $0x48] sm:$0xff]
  %v1579 = vld [vmem:[%s1568 + $0x50] sm:$0xff]
  %v1580 = vld [vmem:[%s1568 + $0x58] sm:$0xff]
  %v1581 = vld [vmem:[%s1568 + $0x60] sm:$0xff]
  %v1582 = vld [vmem:[%s1568 + $0x68] sm:$0xff]
  %v1583 = vld [vmem:[%s1568 + $0x70] sm:$0xff]
  %v1584 = vld [vmem:[%s1568 + $0x78] sm:$0xff]
  %v1585 = vld [vmem:[%s1568 + $0x80] sm:$0xff]
  %v1586 = vld [vmem:[%s1568 + $0x88] sm:$0xff]
  %v1587 = vld [vmem:[%s1568 + $0x90] sm:$0xff]
  %v1588 = vld [vmem:[%s1568 + $0x98] sm:$0xff]
  %v1589 = vld [vmem:[%s1568 + $0xa0] sm:$0xff]
  %v1590 = vld [vmem:[%s1568 + $0xa8] sm:$0xff]
  %v1591 = vld [vmem:[%s1568 + $0xb0] sm:$0xff]
  %v1592 = vld [vmem:[%s1568 + $0xb8] sm:$0xff]
  %v1593 = vld [vmem:[%s1568 + $0xc0] sm:$0xff]
  %v1594 = vld [vmem:[%s1568 + $0xc8] sm:$0xff]
  %v1595 = vld [vmem:[%s1568 + $0xd0] sm:$0xff]
  %v1596 = vld [vmem:[%s1568 + $0xd8] sm:$0xff]
  %v1597 = vld [vmem:[%s1568 + $0xe0] sm:$0xff]
  %v1598 = vld [vmem:[%s1568 + $0xe8] sm:$0xff]
  %v1599 = vld [vmem:[%s1568 + $0xf0] sm:$0xff]
  %v1600 = vld [vmem:[%s1568 + $0xf8] sm:$0xff]
  %v1601 = vld [vmem:[%s1568 + $0x100] sm:$0xff]
  %v1602 = vld [vmem:[%s1568 + $0x108] sm:$0xff]
  %v1603 = vld [vmem:[%s1568 + $0x110] sm:$0xff]
  %v1604 = vld [vmem:[%s1568 + $0x118] sm:$0xff]
  %v1605 = vld [vmem:[%s1568 + $0x120] sm:$0xff]
  %v1606 = vld [vmem:[%s1568 + $0x128] sm:$0xff]
  %v1607 = vld [vmem:[%s1568 + $0x130] sm:$0xff]
  %v1608 = vld [vmem:[%s1568 + $0x138] sm:$0xff]
  %v1609 = vld [vmem:[%s1568 + $0x140] sm:$0xff]
  %v1610 = vld [vmem:[%s1568 + $0x148] sm:$0xff]
  %v1611 = vld [vmem:[%s1568 + $0x150] sm:$0xff]
  %v1612 = vld [vmem:[%s1568 + $0x158] sm:$0xff]
  %v1613 = vld [vmem:[%s1568 + $0x160] sm:$0xff]
  %v1614 = vld [vmem:[%s1568 + $0x168] sm:$0xff]
  %v1615 = vld [vmem:[%s1568 + $0x170] sm:$0xff]
  %v1616 = vld [vmem:[%s1568 + $0x178] sm:$0xff]
  %v1617 = vld [vmem:[%s1568 + $0x180] sm:$0xff]
  %v1618 = vld [vmem:[%s1568 + $0x188] sm:$0xff]
  %v1619 = vld [vmem:[%s1568 + $0x190] sm:$0xff]
  %v1620 = vld [vmem:[%s1568 + $0x198] sm:$0xff]
  %v1621 = vld [vmem:[%s1568 + $0x1a0] sm:$0xff]
  %v1622 = vld [vmem:[%s1568 + $0x1a8] sm:$0xff]
  %v1623 = vld [vmem:[%s1568 + $0x1b0] sm:$0xff]
  %v1624 = vld [vmem:[%s1568 + $0x1b8] sm:$0xff]
  %v1625 = vld [vmem:[%s1568 + $0x1c0] sm:$0xff]
  %v1626 = vld [vmem:[%s1568 + $0x1c8] sm:$0xff]
  %v1627 = vld [vmem:[%s1568 + $0x1d0] sm:$0xff]
  %v1628 = vld [vmem:[%s1568 + $0x1d8] sm:$0xff]
  %v1629 = vld [vmem:[%s1568 + $0x1e0] sm:$0xff]
  %v1630 = vld [vmem:[%s1568 + $0x1e8] sm:$0xff]
  %v1631 = vld [vmem:[%s1568 + $0x1f0] sm:$0xff]
  %v1632 = vld [vmem:[%s1568 + $0x1f8] sm:$0xff]
  %s1633 = scalar_lea.vmem %s1, 8
  %v1634 = vld [vmem:[%s1633] sm:$0x1]
  %v1636 = vlaneseq
  %v1637 = vshrl.u32 %v1636, 7
  %v1638 = vsub.s32 0, %v1637
  %v1639 = vrot.slane %v1634, %v1638
  %v1641 = vmul.f32 %v1569, %v1639
  %v1642 = vmul.f32 %v1570, %v1639
  %v1643 = vmul.f32 %v1571, %v1639
  %v1644 = vmul.f32 %v1572, %v1639
  %v1645 = vmul.f32 %v1573, %v1639
  %v1646 = vmul.f32 %v1574, %v1639
  %v1647 = vmul.f32 %v1575, %v1639
  %v1648 = vmul.f32 %v1576, %v1639
  %v1649 = vmul.f32 %v1577, %v1639
  %v1650 = vmul.f32 %v1578, %v1639
  %v1651 = vmul.f32 %v1579, %v1639
  %v1652 = vmul.f32 %v1580, %v1639
  %v1653 = vmul.f32 %v1581, %v1639
  %v1654 = vmul.f32 %v1582, %v1639
  %v1655 = vmul.f32 %v1583, %v1639
  %v1656 = vmul.f32 %v1584, %v1639
  %v1657 = vmul.f32 %v1585, %v1639
  %v1658 = vmul.f32 %v1586, %v1639
  %v1659 = vmul.f32 %v1587, %v1639
  %v1660 = vmul.f32 %v1588, %v1639
  %v1661 = vmul.f32 %v1589, %v1639
  %v1662 = vmul.f32 %v1590, %v1639
  %v1663 = vmul.f32 %v1591, %v1639
  %v1664 = vmul.f32 %v1592, %v1639
  %v1665 = vmul.f32 %v1593, %v1639
  %v1666 = vmul.f32 %v1594, %v1639
  %v1667 = vmul.f32 %v1595, %v1639
  %v1668 = vmul.f32 %v1596, %v1639
  %v1669 = vmul.f32 %v1597, %v1639
  %v1670 = vmul.f32 %v1598, %v1639
  %v1671 = vmul.f32 %v1599, %v1639
  %v1672 = vmul.f32 %v1600, %v1639
  %v1673 = vmul.f32 %v1601, %v1639
  %v1674 = vmul.f32 %v1602, %v1639
  %v1675 = vmul.f32 %v1603, %v1639
  %v1676 = vmul.f32 %v1604, %v1639
  %v1677 = vmul.f32 %v1605, %v1639
  %v1678 = vmul.f32 %v1606, %v1639
  %v1679 = vmul.f32 %v1607, %v1639
  %v1680 = vmul.f32 %v1608, %v1639
  %v1681 = vmul.f32 %v1609, %v1639
  %v1682 = vmul.f32 %v1610, %v1639
  %v1683 = vmul.f32 %v1611, %v1639
  %v1684 = vmul.f32 %v1612, %v1639
  %v1685 = vmul.f32 %v1613, %v1639
  %v1686 = vmul.f32 %v1614, %v1639
  %v1687 = vmul.f32 %v1615, %v1639
  %v1688 = vmul.f32 %v1616, %v1639
  %v1689 = vmul.f32 %v1617, %v1639
  %v1690 = vmul.f32 %v1618, %v1639
  %v1691 = vmul.f32 %v1619, %v1639
  %v1692 = vmul.f32 %v1620, %v1639
  %v1693 = vmul.f32 %v1621, %v1639
  %v1694 = vmul.f32 %v1622, %v1639
  %v1695 = vmul.f32 %v1623, %v1639
  %v1696 = vmul.f32 %v1624, %v1639
  %v1697 = vmul.f32 %v1625, %v1639
  %v1698 = vmul.f32 %v1626, %v1639
  %v1699 = vmul.f32 %v1627, %v1639
  %v1700 = vmul.f32 %v1628, %v1639
  %v1701 = vmul.f32 %v1629, %v1639
  %v1702 = vmul.f32 %v1630, %v1639
  %v1703 = vmul.f32 %v1631, %v1639
  %v1704 = vmul.f32 %v1632, %v1639
  %v1705 = vadd.f32 %v1504, %v1641
  %v1706 = vadd.f32 %v1505, %v1642
  %v1707 = vadd.f32 %v1506, %v1643
  %v1708 = vadd.f32 %v1507, %v1644
  %v1709 = vadd.f32 %v1508, %v1645
  %v1710 = vadd.f32 %v1509, %v1646
  %v1711 = vadd.f32 %v1510, %v1647
  %v1712 = vadd.f32 %v1511, %v1648
  %v1713 = vadd.f32 %v1512, %v1649
  %v1714 = vadd.f32 %v1513, %v1650
  %v1715 = vadd.f32 %v1514, %v1651
  %v1716 = vadd.f32 %v1515, %v1652
  %v1717 = vadd.f32 %v1516, %v1653
  %v1718 = vadd.f32 %v1517, %v1654
  %v1719 = vadd.f32 %v1518, %v1655
  %v1720 = vadd.f32 %v1519, %v1656
  %v1721 = vadd.f32 %v1520, %v1657
  %v1722 = vadd.f32 %v1521, %v1658
  %v1723 = vadd.f32 %v1522, %v1659
  %v1724 = vadd.f32 %v1523, %v1660
  %v1725 = vadd.f32 %v1524, %v1661
  %v1726 = vadd.f32 %v1525, %v1662
  %v1727 = vadd.f32 %v1526, %v1663
  %v1728 = vadd.f32 %v1527, %v1664
  %v1729 = vadd.f32 %v1528, %v1665
  %v1730 = vadd.f32 %v1529, %v1666
  %v1731 = vadd.f32 %v1530, %v1667
  %v1732 = vadd.f32 %v1531, %v1668
  %v1733 = vadd.f32 %v1532, %v1669
  %v1734 = vadd.f32 %v1533, %v1670
  %v1735 = vadd.f32 %v1534, %v1671
  %v1736 = vadd.f32 %v1535, %v1672
  %v1737 = vadd.f32 %v1536, %v1673
  %v1738 = vadd.f32 %v1537, %v1674
  %v1739 = vadd.f32 %v1538, %v1675
  %v1740 = vadd.f32 %v1539, %v1676
  %v1741 = vadd.f32 %v1540, %v1677
  %v1742 = vadd.f32 %v1541, %v1678
  %v1743 = vadd.f32 %v1542, %v1679
  %v1744 = vadd.f32 %v1543, %v1680
  %v1745 = vadd.f32 %v1544, %v1681
  %v1746 = vadd.f32 %v1545, %v1682
  %v1747 = vadd.f32 %v1546, %v1683
  %v1748 = vadd.f32 %v1547, %v1684
  %v1749 = vadd.f32 %v1548, %v1685
  %v1750 = vadd.f32 %v1549, %v1686
  %v1751 = vadd.f32 %v1550, %v1687
  %v1752 = vadd.f32 %v1551, %v1688
  %v1753 = vadd.f32 %v1552, %v1689
  %v1754 = vadd.f32 %v1553, %v1690
  %v1755 = vadd.f32 %v1554, %v1691
  %v1756 = vadd.f32 %v1555, %v1692
  %v1757 = vadd.f32 %v1556, %v1693
  %v1758 = vadd.f32 %v1557, %v1694
  %v1759 = vadd.f32 %v1558, %v1695
  %v1760 = vadd.f32 %v1559, %v1696
  %v1761 = vadd.f32 %v1560, %v1697
  %v1762 = vadd.f32 %v1561, %v1698
  %v1763 = vadd.f32 %v1562, %v1699
  %v1764 = vadd.f32 %v1563, %v1700
  %v1765 = vadd.f32 %v1564, %v1701
  %v1766 = vadd.f32 %v1565, %v1702
  %v1767 = vadd.f32 %v1566, %v1703
  %v1768 = vadd.f32 %v1567, %v1704
  %v1769 = vld [vmem:[%s2] sm:$0x1]
  %v1771 = vlaneseq
  %v1772 = vshrl.u32 %v1771, 7
  %v1773 = vsub.s32 0, %v1772
  %v1774 = vrot.slane %v1769, %v1773
  %v1776 = vmul.f32 %v1705, %v1774
  %v1777 = vmul.f32 %v1706, %v1774
  %v1778 = vmul.f32 %v1707, %v1774
  %v1779 = vmul.f32 %v1708, %v1774
  %v1780 = vmul.f32 %v1709, %v1774
  %v1781 = vmul.f32 %v1710, %v1774
  %v1782 = vmul.f32 %v1711, %v1774
  %v1783 = vmul.f32 %v1712, %v1774
  %v1784 = vmul.f32 %v1713, %v1774
  %v1785 = vmul.f32 %v1714, %v1774
  %v1786 = vmul.f32 %v1715, %v1774
  %v1787 = vmul.f32 %v1716, %v1774
  %v1788 = vmul.f32 %v1717, %v1774
  %v1789 = vmul.f32 %v1718, %v1774
  %v1790 = vmul.f32 %v1719, %v1774
  %v1791 = vmul.f32 %v1720, %v1774
  %v1792 = vmul.f32 %v1721, %v1774
  %v1793 = vmul.f32 %v1722, %v1774
  %v1794 = vmul.f32 %v1723, %v1774
  %v1795 = vmul.f32 %v1724, %v1774
  %v1796 = vmul.f32 %v1725, %v1774
  %v1797 = vmul.f32 %v1726, %v1774
  %v1798 = vmul.f32 %v1727, %v1774
  %v1799 = vmul.f32 %v1728, %v1774
  %v1800 = vmul.f32 %v1729, %v1774
  %v1801 = vmul.f32 %v1730, %v1774
  %v1802 = vmul.f32 %v1731, %v1774
  %v1803 = vmul.f32 %v1732, %v1774
  %v1804 = vmul.f32 %v1733, %v1774
  %v1805 = vmul.f32 %v1734, %v1774
  %v1806 = vmul.f32 %v1735, %v1774
  %v1807 = vmul.f32 %v1736, %v1774
  %v1808 = vmul.f32 %v1737, %v1774
  %v1809 = vmul.f32 %v1738, %v1774
  %v1810 = vmul.f32 %v1739, %v1774
  %v1811 = vmul.f32 %v1740, %v1774
  %v1812 = vmul.f32 %v1741, %v1774
  %v1813 = vmul.f32 %v1742, %v1774
  %v1814 = vmul.f32 %v1743, %v1774
  %v1815 = vmul.f32 %v1744, %v1774
  %v1816 = vmul.f32 %v1745, %v1774
  %v1817 = vmul.f32 %v1746, %v1774
  %v1818 = vmul.f32 %v1747, %v1774
  %v1819 = vmul.f32 %v1748, %v1774
  %v1820 = vmul.f32 %v1749, %v1774
  %v1821 = vmul.f32 %v1750, %v1774
  %v1822 = vmul.f32 %v1751, %v1774
  %v1823 = vmul.f32 %v1752, %v1774
  %v1824 = vmul.f32 %v1753, %v1774
  %v1825 = vmul.f32 %v1754, %v1774
  %v1826 = vmul.f32 %v1755, %v1774
  %v1827 = vmul.f32 %v1756, %v1774
  %v1828 = vmul.f32 %v1757, %v1774
  %v1829 = vmul.f32 %v1758, %v1774
  %v1830 = vmul.f32 %v1759, %v1774
  %v1831 = vmul.f32 %v1760, %v1774
  %v1832 = vmul.f32 %v1761, %v1774
  %v1833 = vmul.f32 %v1762, %v1774
  %v1834 = vmul.f32 %v1763, %v1774
  %v1835 = vmul.f32 %v1764, %v1774
  %v1836 = vmul.f32 %v1765, %v1774
  %v1837 = vmul.f32 %v1766, %v1774
  %v1838 = vmul.f32 %v1767, %v1774
  %v1839 = vmul.f32 %v1768, %v1774
  %v1840 = vld [vmem:[%s3] sm:$0x1]
  %v1842 = vlaneseq
  %v1843 = vshrl.u32 %v1842, 7
  %v1844 = vsub.s32 0, %v1843
  %v1845 = vrot.slane %v1840, %v1844
  %v1847 = vadd.f32 %v1776, %v1845
  %v1848 = vadd.f32 %v1777, %v1845
  %v1849 = vadd.f32 %v1778, %v1845
  %v1850 = vadd.f32 %v1779, %v1845
  %v1851 = vadd.f32 %v1780, %v1845
  %v1852 = vadd.f32 %v1781, %v1845
  %v1853 = vadd.f32 %v1782, %v1845
  %v1854 = vadd.f32 %v1783, %v1845
  %v1855 = vadd.f32 %v1784, %v1845
  %v1856 = vadd.f32 %v1785, %v1845
  %v1857 = vadd.f32 %v1786, %v1845
  %v1858 = vadd.f32 %v1787, %v1845
  %v1859 = vadd.f32 %v1788, %v1845
  %v1860 = vadd.f32 %v1789, %v1845
  %v1861 = vadd.f32 %v1790, %v1845
  %v1862 = vadd.f32 %v1791, %v1845
  %v1863 = vadd.f32 %v1792, %v1845
  %v1864 = vadd.f32 %v1793, %v1845
  %v1865 = vadd.f32 %v1794, %v1845
  %v1866 = vadd.f32 %v1795, %v1845
  %v1867 = vadd.f32 %v1796, %v1845
  %v1868 = vadd.f32 %v1797, %v1845
  %v1869 = vadd.f32 %v1798, %v1845
  %v1870 = vadd.f32 %v1799, %v1845
  %v1871 = vadd.f32 %v1800, %v1845
  %v1872 = vadd.f32 %v1801, %v1845
  %v1873 = vadd.f32 %v1802, %v1845
  %v1874 = vadd.f32 %v1803, %v1845
  %v1875 = vadd.f32 %v1804, %v1845
  %v1876 = vadd.f32 %v1805, %v1845
  %v1877 = vadd.f32 %v1806, %v1845
  %v1878 = vadd.f32 %v1807, %v1845
  %v1879 = vadd.f32 %v1808, %v1845
  %v1880 = vadd.f32 %v1809, %v1845
  %v1881 = vadd.f32 %v1810, %v1845
  %v1882 = vadd.f32 %v1811, %v1845
  %v1883 = vadd.f32 %v1812, %v1845
  %v1884 = vadd.f32 %v1813, %v1845
  %v1885 = vadd.f32 %v1814, %v1845
  %v1886 = vadd.f32 %v1815, %v1845
  %v1887 = vadd.f32 %v1816, %v1845
  %v1888 = vadd.f32 %v1817, %v1845
  %v1889 = vadd.f32 %v1818, %v1845
  %v1890 = vadd.f32 %v1819, %v1845
  %v1891 = vadd.f32 %v1820, %v1845
  %v1892 = vadd.f32 %v1821, %v1845
  %v1893 = vadd.f32 %v1822, %v1845
  %v1894 = vadd.f32 %v1823, %v1845
  %v1895 = vadd.f32 %v1824, %v1845
  %v1896 = vadd.f32 %v1825, %v1845
  %v1897 = vadd.f32 %v1826, %v1845
  %v1898 = vadd.f32 %v1827, %v1845
  %v1899 = vadd.f32 %v1828, %v1845
  %v1900 = vadd.f32 %v1829, %v1845
  %v1901 = vadd.f32 %v1830, %v1845
  %v1902 = vadd.f32 %v1831, %v1845
  %v1903 = vadd.f32 %v1832, %v1845
  %v1904 = vadd.f32 %v1833, %v1845
  %v1905 = vadd.f32 %v1834, %v1845
  %v1906 = vadd.f32 %v1835, %v1845
  %v1907 = vadd.f32 %v1836, %v1845
  %v1908 = vadd.f32 %v1837, %v1845
  %v1909 = vadd.f32 %v1838, %v1845
  %v1910 = vadd.f32 %v1839, %v1845
  %v1911 = vmax.f32 %v1847, 0.0
  %v1912 = vmax.f32 %v1848, 0.0
  %v1913 = vmax.f32 %v1849, 0.0
  %v1914 = vmax.f32 %v1850, 0.0
  %v1915 = vmax.f32 %v1851, 0.0
  %v1916 = vmax.f32 %v1852, 0.0
  %v1917 = vmax.f32 %v1853, 0.0
  %v1918 = vmax.f32 %v1854, 0.0
  %v1919 = vmax.f32 %v1855, 0.0
  %v1920 = vmax.f32 %v1856, 0.0
  %v1921 = vmax.f32 %v1857, 0.0
  %v1922 = vmax.f32 %v1858, 0.0
  %v1923 = vmax.f32 %v1859, 0.0
  %v1924 = vmax.f32 %v1860, 0.0
  %v1925 = vmax.f32 %v1861, 0.0
  %v1926 = vmax.f32 %v1862, 0.0
  %v1927 = vmax.f32 %v1863, 0.0
  %v1928 = vmax.f32 %v1864, 0.0
  %v1929 = vmax.f32 %v1865, 0.0
  %v1930 = vmax.f32 %v1866, 0.0
  %v1931 = vmax.f32 %v1867, 0.0
  %v1932 = vmax.f32 %v1868, 0.0
  %v1933 = vmax.f32 %v1869, 0.0
  %v1934 = vmax.f32 %v1870, 0.0
  %v1935 = vmax.f32 %v1871, 0.0
  %v1936 = vmax.f32 %v1872, 0.0
  %v1937 = vmax.f32 %v1873, 0.0
  %v1938 = vmax.f32 %v1874, 0.0
  %v1939 = vmax.f32 %v1875, 0.0
  %v1940 = vmax.f32 %v1876, 0.0
  %v1941 = vmax.f32 %v1877, 0.0
  %v1942 = vmax.f32 %v1878, 0.0
  %v1943 = vmax.f32 %v1879, 0.0
  %v1944 = vmax.f32 %v1880, 0.0
  %v1945 = vmax.f32 %v1881, 0.0
  %v1946 = vmax.f32 %v1882, 0.0
  %v1947 = vmax.f32 %v1883, 0.0
  %v1948 = vmax.f32 %v1884, 0.0
  %v1949 = vmax.f32 %v1885, 0.0
  %v1950 = vmax.f32 %v1886, 0.0
  %v1951 = vmax.f32 %v1887, 0.0
  %v1952 = vmax.f32 %v1888, 0.0
  %v1953 = vmax.f32 %v1889, 0.0
  %v1954 = vmax.f32 %v1890, 0.0
  %v1955 = vmax.f32 %v1891, 0.0
  %v1956 = vmax.f32 %v1892, 0.0
  %v1957 = vmax.f32 %v1893, 0.0
  %v1958 = vmax.f32 %v1894, 0.0
  %v1959 = vmax.f32 %v1895, 0.0
  %v1960 = vmax.f32 %v1896, 0.0
  %v1961 = vmax.f32 %v1897, 0.0
  %v1962 = vmax.f32 %v1898, 0.0
  %v1963 = vmax.f32 %v1899, 0.0
  %v1964 = vmax.f32 %v1900, 0.0
  %v1965 = vmax.f32 %v1901, 0.0
  %v1966 = vmax.f32 %v1902, 0.0
  %v1967 = vmax.f32 %v1903, 0.0
  %v1968 = vmax.f32 %v1904, 0.0
  %v1969 = vmax.f32 %v1905, 0.0
  %v1970 = vmax.f32 %v1906, 0.0
  %v1971 = vmax.f32 %v1907, 0.0
  %v1972 = vmax.f32 %v1908, 0.0
  %v1973 = vmax.f32 %v1909, 0.0
  %v1974 = vmax.f32 %v1910, 0.0
  %v1975 = vld [vmem:[%s4] sm:$0xf]
  %vm1976 = vcmask 31744
  %v1978 = vsel %vm1976, %v1911, 0
  %v1981 = vsel %vm1976, %v1912, 0
  %v1984 = vsel %vm1976, %v1913, 0
  %v1987 = vsel %vm1976, %v1914, 0
  %v1990 = vsel %vm1976, %v1915, 0
  %v1993 = vsel %vm1976, %v1916, 0
  %v1996 = vsel %vm1976, %v1917, 0
  %v1999 = vsel %vm1976, %v1918, 0
  %v2002 = vsel %vm1976, %v1919, 0
  %v2005 = vsel %vm1976, %v1920, 0
  %v2008 = vsel %vm1976, %v1921, 0
  %v2011 = vsel %vm1976, %v1922, 0
  %v2014 = vsel %vm1976, %v1923, 0
  %v2017 = vsel %vm1976, %v1924, 0
  %v2020 = vsel %vm1976, %v1925, 0
  %v2023 = vsel %vm1976, %v1926, 0
  %v2026 = vsel %vm1976, %v1927, 0
  %v2029 = vsel %vm1976, %v1928, 0
  %v2032 = vsel %vm1976, %v1929, 0
  %v2035 = vsel %vm1976, %v1930, 0
  %v2038 = vsel %vm1976, %v1931, 0
  %v2041 = vsel %vm1976, %v1932, 0
  %v2044 = vsel %vm1976, %v1933, 0
  %v2047 = vsel %vm1976, %v1934, 0
  %v2050 = vsel %vm1976, %v1935, 0
  %v2053 = vsel %vm1976, %v1936, 0
  %v2056 = vsel %vm1976, %v1937, 0
  %v2059 = vsel %vm1976, %v1938, 0
  %v2062 = vsel %vm1976, %v1939, 0
  %v2065 = vsel %vm1976, %v1940, 0
  %v2068 = vsel %vm1976, %v1941, 0
  %v2071 = vsel %vm1976, %v1942, 0
  %v2074 = vsel %vm1976, %v1943, 0
  %v2077 = vsel %vm1976, %v1944, 0
  %v2080 = vsel %vm1976, %v1945, 0
  %v2083 = vsel %vm1976, %v1946, 0
  %v2086 = vsel %vm1976, %v1947, 0
  %v2089 = vsel %vm1976, %v1948, 0
  %v2092 = vsel %vm1976, %v1949, 0
  %v2095 = vsel %vm1976, %v1950, 0
  %v2098 = vsel %vm1976, %v1951, 0
  %v2101 = vsel %vm1976, %v1952, 0
  %v2104 = vsel %vm1976, %v1953, 0
  %v2107 = vsel %vm1976, %v1954, 0
  %v2110 = vsel %vm1976, %v1955, 0
  %v2113 = vsel %vm1976, %v1956, 0
  %v2116 = vsel %vm1976, %v1957, 0
  %v2119 = vsel %vm1976, %v1958, 0
  %v2122 = vsel %vm1976, %v1959, 0
  %v2125 = vsel %vm1976, %v1960, 0
  %v2128 = vsel %vm1976, %v1961, 0
  %v2131 = vsel %vm1976, %v1962, 0
  %v2134 = vsel %vm1976, %v1963, 0
  %v2137 = vsel %vm1976, %v1964, 0
  %v2140 = vsel %vm1976, %v1965, 0
  %v2143 = vsel %vm1976, %v1966, 0
  %v2146 = vsel %vm1976, %v1967, 0
  %v2149 = vsel %vm1976, %v1968, 0
  %v2152 = vsel %vm1976, %v1969, 0
  %v2155 = vsel %vm1976, %v1970, 0
  %v2158 = vsel %vm1976, %v1971, 0
  %v2161 = vsel %vm1976, %v1972, 0
  %v2164 = vsel %vm1976, %v1973, 0
  %v2167 = vsel %vm1976, %v1974, 0
  %vm2169 = vcmask 1043456
  %v2171 = vsel %vm2169, %v1975, 0
  %2173 = vmatprep.subr.mxu0 0.0
  %2174 = vmatpush1.msra.mxu0 %v2171
  %2175 = vmatprep.subr.mxu0 0.0
  %2176 = vmatpush1.msra.mxu0 0.0
  %2177 = vmatprep.subr.mxu0 0.0
  %2178 = vmatpush1.msra.mxu0 0.0
  %2179 = vmatprep.subr.mxu0 0.0
  %2180 = vmatpush1.msra.mxu0 0.0
  %2181 = vmatprep.subr.mxu0 0.0
  %2182 = vmatpush1.msra.mxu0 0.0
  %2183 = vmatprep.subr.mxu0 0.0
  %2184 = vmatpush1.msra.mxu0 0.0
  %2185 = vmatprep.subr.mxu0 0.0
  %2186 = vmatpush1.msra.mxu0 0.0
  %2187 = vmatprep.subr.mxu0 0.0
  %2188 = vmatpush1.msra.mxu0 0.0
  %2189 = vmatprep.subr.mxu0 0.0
  %2190 = vmatpush1.msra.mxu0 0.0
  %2191 = vmatprep.subr.mxu0 0.0
  %2192 = vmatpush1.msra.mxu0 0.0
  %2193 = vmatprep.subr.mxu0 0.0
  %2194 = vmatpush1.msra.mxu0 0.0
  %2195 = vmatprep.subr.mxu0 0.0
  %2196 = vmatpush1.msra.mxu0 0.0
  %2197 = vmatprep.subr.mxu0 0.0
  %2198 = vmatpush1.msra.mxu0 0.0
  %2199 = vmatprep.subr.mxu0 0.0
  %2200 = vmatpush1.msra.mxu0 0.0
  %2201 = vmatprep.subr.mxu0 0.0
  %2202 = vmatpush1.msra.mxu0 0.0
  %2203 = vmatprep.subr.mxu0 0.0
  %2204 = vmatpush1.msra.mxu0 0.0
  %2205 = vmatprep.subr.mxu0 0.0
  %2206 = vmatpush1.msra.mxu0 0.0
  %2207 = vmatprep.subr.mxu0 0.0
  %2208 = vmatpush1.msra.mxu0 0.0
  %2209 = vmatprep.subr.mxu0 0.0
  %2210 = vmatpush1.msra.mxu0 0.0
  %2211 = vmatprep.subr.mxu0 0.0
  %2212 = vmatpush1.msra.mxu0 0.0
  %2213 = vmatprep.subr.mxu0 0.0
  %2214 = vmatpush1.msra.mxu0 0.0
  %2215 = vmatprep.subr.mxu0 0.0
  %2216 = vmatpush1.msra.mxu0 0.0
  %2217 = vmatprep.subr.mxu0 0.0
  %2218 = vmatpush1.msra.mxu0 0.0
  %2219 = vmatprep.subr.mxu0 0.0
  %2220 = vmatpush1.msra.mxu0 0.0
  %2221 = vmatprep.subr.mxu0 0.0
  %2222 = vmatpush1.msra.mxu0 0.0
  %2223 = vmatprep.subr.mxu0 0.0
  %2224 = vmatpush1.msra.mxu0 0.0
  %2225 = vmatprep.subr.mxu0 0.0
  %2226 = vmatpush1.msra.mxu0 0.0
  %2227 = vmatprep.subr.mxu0 0.0
  %2228 = vmatpush1.msra.mxu0 0.0
  %2229 = vmatprep.subr.mxu0 0.0
  %2230 = vmatpush1.msra.mxu0 0.0
  %2231 = vmatprep.subr.mxu0 0.0
  %2232 = vmatpush1.msra.mxu0 0.0
  %2233 = vmatprep.subr.mxu0 0.0
  %2234 = vmatpush1.msra.mxu0 0.0
  %2235 = vmatprep.subr.mxu0 0.0
  %2236 = vmatpush1.msra.mxu0 0.0
  %2237 = vmatprep.mubr.f32.mxu0 0.0
  %2238 = vmatmul.mubr.f32.gmra.mrb[0].mxu0 %v1978
  %v2239 = vpop.f32.mrb[0].mxu0
  %v2240 = vadd.f32 0.0, %v2239
  %v2241 = vpop.f32.mrb[0].mxu0
  %2242 = vmatprep.mubr.f32.mxu0 0.0
  %2243 = vmatmul.mubr.f32.gmra.mrb[0].mxu0 %v1981
  %v2244 = vpop.f32.mrb[0].mxu0
  %v2245 = vadd.f32 0.0, %v2244
  %v2246 = vpop.f32.mrb[0].mxu0
  %2247 = vmatprep.mubr.f32.mxu0 0.0
  %2248 = vmatmul.mubr.f32.gmra.mrb[0].mxu0 %v1984
  %v2249 = vpop.f32.mrb[0].mxu0
  %v2250 = vadd.f32 0.0, %v2249
  %v2251 = vpop.f32.mrb[0].mxu0
  %2252 = vmatprep.mubr.f32.mxu0 0.0
  %2253 = vmatmul.mubr.f32.gmra.mrb[0].mxu0 %v1987
  %v2254 = vpop.f32.mrb[0].mxu0
  %v2255 = vadd.f32 0.0, %v2254
  %v2256 = vpop.f32.mrb[0].mxu0
  %2257 = vmatprep.mubr.f32.mxu0 0.0
  %2258 = vmatmul.mubr.f32.gmra.mrb[0].mxu0 %v1990
  %v2259 = vpop.f32.mrb[0].mxu0
  %v2260 = vadd.f32 0.0, %v2259
  %v2261 = vpop.f32.mrb[0].mxu0
  %2262 = vmatprep.mubr.f32.mxu0 0.0
  %2263 = vmatmul.mubr.f32.gmra.mrb[0].mxu0 %v1993
  %v2264 = vpop.f32.mrb[0].mxu0
  %v2265 = vadd.f32 0.0, %v2264
  %v2266 = vpop.f32.mrb[0].mxu0
  %2267 = vmatprep.mubr.f32.mxu0 0.0
  %2268 = vmatmul.mubr.f32.gmra.mrb[0].mxu0 %v1996
  %v2269 = vpop.f32.mrb[0].mxu0
  %v2270 = vadd.f32 0.0, %v2269
  %v2271 = vpop.f32.mrb[0].mxu0
  %2272 = vmatprep.mubr.f32.mxu0 0.0
  %2273 = vmatmul.mubr.f32.gmra.mrb[0].mxu0 %v1999
  %v2274 = vpop.f32.mrb[0].mxu0
  %v2275 = vadd.f32 0.0, %v2274
  %v2276 = vpop.f32.mrb[0].mxu0
  %2277 = vmatprep.mubr.f32.mxu0 0.0
  %2278 = vmatmul.mubr.f32.gmra.mrb[0].mxu0 %v2002
  %v2279 = vpop.f32.mrb[0].mxu0
  %v2280 = vadd.f32 0.0, %v2279
  %v2281 = vpop.f32.mrb[0].mxu0
  %2282 = vmatprep.mubr.f32.mxu0 0.0
  %2283 = vmatmul.mubr.f32.gmra.mrb[0].mxu0 %v2005
  %v2284 = vpop.f32.mrb[0].mxu0
  %v2285 = vadd.f32 0.0, %v2284
  %v2286 = vpop.f32.mrb[0].mxu0
  %2287 = vmatprep.mubr.f32.mxu0 0.0
  %2288 = vmatmul.mubr.f32.gmra.mrb[0].mxu0 %v2008
  %v2289 = vpop.f32.mrb[0].mxu0
  %v2290 = vadd.f32 0.0, %v2289
  %v2291 = vpop.f32.mrb[0].mxu0
  %2292 = vmatprep.mubr.f32.mxu0 0.0
  %2293 = vmatmul.mubr.f32.gmra.mrb[0].mxu0 %v2011
  %v2294 = vpop.f32.mrb[0].mxu0
  %v2295 = vadd.f32 0.0, %v2294
  %v2296 = vpop.f32.mrb[0].mxu0
  %2297 = vmatprep.mubr.f32.mxu0 0.0
  %2298 = vmatmul.mubr.f32.gmra.mrb[0].mxu0 %v2014
  %v2299 = vpop.f32.mrb[0].mxu0
  %v2300 = vadd.f32 0.0, %v2299
  %v2301 = vpop.f32.mrb[0].mxu0
  %2302 = vmatprep.mubr.f32.mxu0 0.0
  %2303 = vmatmul.mubr.f32.gmra.mrb[0].mxu0 %v2017
  %v2304 = vpop.f32.mrb[0].mxu0
  %v2305 = vadd.f32 0.0, %v2304
  %v2306 = vpop.f32.mrb[0].mxu0
  %2307 = vmatprep.mubr.f32.mxu0 0.0
  %2308 = vmatmul.mubr.f32.gmra.mrb[0].mxu0 %v2020
  %v2309 = vpop.f32.mrb[0].mxu0
  %v2310 = vadd.f32 0.0, %v2309
  %v2311 = vpop.f32.mrb[0].mxu0
  %2312 = vmatprep.mubr.f32.mxu0 0.0
  %2313 = vmatmul.mubr.f32.gmra.mrb[0].mxu0 %v2023
  %v2314 = vpop.f32.mrb[0].mxu0
  %v2315 = vadd.f32 0.0, %v2314
  %v2316 = vpop.f32.mrb[0].mxu0
  %2317 = vmatprep.mubr.f32.mxu0 0.0
  %2318 = vmatmul.mubr.f32.gmra.mrb[0].mxu0 %v2026
  %v2319 = vpop.f32.mrb[0].mxu0
  %v2320 = vadd.f32 0.0, %v2319
  %v2321 = vpop.f32.mrb[0].mxu0
  %2322 = vmatprep.mubr.f32.mxu0 0.0
  %2323 = vmatmul.mubr.f32.gmra.mrb[0].mxu0 %v2029
  %v2324 = vpop.f32.mrb[0].mxu0
  %v2325 = vadd.f32 0.0, %v2324
  %v2326 = vpop.f32.mrb[0].mxu0
  %2327 = vmatprep.mubr.f32.mxu0 0.0
  %2328 = vmatmul.mubr.f32.gmra.mrb[0].mxu0 %v2032
  %v2329 = vpop.f32.mrb[0].mxu0
  %v2330 = vadd.f32 0.0, %v2329
  %v2331 = vpop.f32.mrb[0].mxu0
  %2332 = vmatprep.mubr.f32.mxu0 0.0
  %2333 = vmatmul.mubr.f32.gmra.mrb[0].mxu0 %v2035
  %v2334 = vpop.f32.mrb[0].mxu0
  %v2335 = vadd.f32 0.0, %v2334
  %v2336 = vpop.f32.mrb[0].mxu0
  %2337 = vmatprep.mubr.f32.mxu0 0.0
  %2338 = vmatmul.mubr.f32.gmra.mrb[0].mxu0 %v2038
  %v2339 = vpop.f32.mrb[0].mxu0
  %v2340 = vadd.f32 0.0, %v2339
  %v2341 = vpop.f32.mrb[0].mxu0
  %2342 = vmatprep.mubr.f32.mxu0 0.0
  %2343 = vmatmul.mubr.f32.gmra.mrb[0].mxu0 %v2041
  %v2344 = vpop.f32.mrb[0].mxu0
  %v2345 = vadd.f32 0.0, %v2344
  %v2346 = vpop.f32.mrb[0].mxu0
  %2347 = vmatprep.mubr.f32.mxu0 0.0
  %2348 = vmatmul.mubr.f32.gmra.mrb[0].mxu0 %v2044
  %v2349 = vpop.f32.mrb[0].mxu0
  %v2350 = vadd.f32 0.0, %v2349
  %v2351 = vpop.f32.mrb[0].mxu0
  %2352 = vmatprep.mubr.f32.mxu0 0.0
  %2353 = vmatmul.mubr.f32.gmra.mrb[0].mxu0 %v2047
  %v2354 = vpop.f32.mrb[0].mxu0
  %v2355 = vadd.f32 0.0, %v2354
  %v2356 = vpop.f32.mrb[0].mxu0
  %2357 = vmatprep.mubr.f32.mxu0 0.0
  %2358 = vmatmul.mubr.f32.gmra.mrb[0].mxu0 %v2050
  %v2359 = vpop.f32.mrb[0].mxu0
  %v2360 = vadd.f32 0.0, %v2359
  %v2361 = vpop.f32.mrb[0].mxu0
  %2362 = vmatprep.mubr.f32.mxu0 0.0
  %2363 = vmatmul.mubr.f32.gmra.mrb[0].mxu0 %v2053
  %v2364 = vpop.f32.mrb[0].mxu0
  %v2365 = vadd.f32 0.0, %v2364
  %v2366 = vpop.f32.mrb[0].mxu0
  %2367 = vmatprep.mubr.f32.mxu0 0.0
  %2368 = vmatmul.mubr.f32.gmra.mrb[0].mxu0 %v2056
  %v2369 = vpop.f32.mrb[0].mxu0
  %v2370 = vadd.f32 0.0, %v2369
  %v2371 = vpop.f32.mrb[0].mxu0
  %2372 = vmatprep.mubr.f32.mxu0 0.0
  %2373 = vmatmul.mubr.f32.gmra.mrb[0].mxu0 %v2059
  %v2374 = vpop.f32.mrb[0].mxu0
  %v2375 = vadd.f32 0.0, %v2374
  %v2376 = vpop.f32.mrb[0].mxu0
  %2377 = vmatprep.mubr.f32.mxu0 0.0
  %2378 = vmatmul.mubr.f32.gmra.mrb[0].mxu0 %v2062
  %v2379 = vpop.f32.mrb[0].mxu0
  %v2380 = vadd.f32 0.0, %v2379
  %v2381 = vpop.f32.mrb[0].mxu0
  %2382 = vmatprep.mubr.f32.mxu0 0.0
  %2383 = vmatmul.mubr.f32.gmra.mrb[0].mxu0 %v2065
  %v2384 = vpop.f32.mrb[0].mxu0
  %v2385 = vadd.f32 0.0, %v2384
  %v2386 = vpop.f32.mrb[0].mxu0
  %2387 = vmatprep.mubr.f32.mxu0 0.0
  %2388 = vmatmul.mubr.f32.gmra.mrb[0].mxu0 %v2068
  %v2389 = vpop.f32.mrb[0].mxu0
  %v2390 = vadd.f32 0.0, %v2389
  %v2391 = vpop.f32.mrb[0].mxu0
  %2392 = vmatprep.mubr.f32.mxu0 0.0
  %2393 = vmatmul.mubr.f32.gmra.mrb[0].mxu0 %v2071
  %v2394 = vpop.f32.mrb[0].mxu0
  %v2395 = vadd.f32 0.0, %v2394
  %v2396 = vpop.f32.mrb[0].mxu0
  %2397 = vmatprep.mubr.f32.mxu0 0.0
  %2398 = vmatmul.mubr.f32.gmra.mrb[0].mxu0 %v2074
  %v2399 = vpop.f32.mrb[0].mxu0
  %v2400 = vadd.f32 0.0, %v2399
  %v2401 = vpop.f32.mrb[0].mxu0
  %2402 = vmatprep.mubr.f32.mxu0 0.0
  %2403 = vmatmul.mubr.f32.gmra.mrb[0].mxu0 %v2077
  %v2404 = vpop.f32.mrb[0].mxu0
  %v2405 = vadd.f32 0.0, %v2404
  %v2406 = vpop.f32.mrb[0].mxu0
  %2407 = vmatprep.mubr.f32.mxu0 0.0
  %2408 = vmatmul.mubr.f32.gmra.mrb[0].mxu0 %v2080
  %v2409 = vpop.f32.mrb[0].mxu0
  %v2410 = vadd.f32 0.0, %v2409
  %v2411 = vpop.f32.mrb[0].mxu0
  %2412 = vmatprep.mubr.f32.mxu0 0.0
  %2413 = vmatmul.mubr.f32.gmra.mrb[0].mxu0 %v2083
  %v2414 = vpop.f32.mrb[0].mxu0
  %v2415 = vadd.f32 0.0, %v2414
  %v2416 = vpop.f32.mrb[0].mxu0
  %2417 = vmatprep.mubr.f32.mxu0 0.0
  %2418 = vmatmul.mubr.f32.gmra.mrb[0].mxu0 %v2086
  %v2419 = vpop.f32.mrb[0].mxu0
  %v2420 = vadd.f32 0.0, %v2419
  %v2421 = vpop.f32.mrb[0].mxu0
  %2422 = vmatprep.mubr.f32.mxu0 0.0
  %2423 = vmatmul.mubr.f32.gmra.mrb[0].mxu0 %v2089
  %v2424 = vpop.f32.mrb[0].mxu0
  %v2425 = vadd.f32 0.0, %v2424
  %v2426 = vpop.f32.mrb[0].mxu0
  %2427 = vmatprep.mubr.f32.mxu0 0.0
  %2428 = vmatmul.mubr.f32.gmra.mrb[0].mxu0 %v2092
  %v2429 = vpop.f32.mrb[0].mxu0
  %v2430 = vadd.f32 0.0, %v2429
  %v2431 = vpop.f32.mrb[0].mxu0
  %2432 = vmatprep.mubr.f32.mxu0 0.0
  %2433 = vmatmul.mubr.f32.gmra.mrb[0].mxu0 %v2095
  %v2434 = vpop.f32.mrb[0].mxu0
  %v2435 = vadd.f32 0.0, %v2434
  %v2436 = vpop.f32.mrb[0].mxu0
  %2437 = vmatprep.mubr.f32.mxu0 0.0
  %2438 = vmatmul.mubr.f32.gmra.mrb[0].mxu0 %v2098
  %v2439 = vpop.f32.mrb[0].mxu0
  %v2440 = vadd.f32 0.0, %v2439
  %v2441 = vpop.f32.mrb[0].mxu0
  %2442 = vmatprep.mubr.f32.mxu0 0.0
  %2443 = vmatmul.mubr.f32.gmra.mrb[0].mxu0 %v2101
  %v2444 = vpop.f32.mrb[0].mxu0
  %v2445 = vadd.f32 0.0, %v2444
  %v2446 = vpop.f32.mrb[0].mxu0
  %2447 = vmatprep.mubr.f32.mxu0 0.0
  %2448 = vmatmul.mubr.f32.gmra.mrb[0].mxu0 %v2104
  %v2449 = vpop.f32.mrb[0].mxu0
  %v2450 = vadd.f32 0.0, %v2449
  %v2451 = vpop.f32.mrb[0].mxu0
  %2452 = vmatprep.mubr.f32.mxu0 0.0
  %2453 = vmatmul.mubr.f32.gmra.mrb[0].mxu0 %v2107
  %v2454 = vpop.f32.mrb[0].mxu0
  %v2455 = vadd.f32 0.0, %v2454
  %v2456 = vpop.f32.mrb[0].mxu0
  %2457 = vmatprep.mubr.f32.mxu0 0.0
  %2458 = vmatmul.mubr.f32.gmra.mrb[0].mxu0 %v2110
  %v2459 = vpop.f32.mrb[0].mxu0
  %v2460 = vadd.f32 0.0, %v2459
  %v2461 = vpop.f32.mrb[0].mxu0
  %2462 = vmatprep.mubr.f32.mxu0 0.0
  %2463 = vmatmul.mubr.f32.gmra.mrb[0].mxu0 %v2113
  %v2464 = vpop.f32.mrb[0].mxu0
  %v2465 = vadd.f32 0.0, %v2464
  %v2466 = vpop.f32.mrb[0].mxu0
  %2467 = vmatprep.mubr.f32.mxu0 0.0
  %2468 = vmatmul.mubr.f32.gmra.mrb[0].mxu0 %v2116
  %v2469 = vpop.f32.mrb[0].mxu0
  %v2470 = vadd.f32 0.0, %v2469
  %v2471 = vpop.f32.mrb[0].mxu0
  %2472 = vmatprep.mubr.f32.mxu0 0.0
  %2473 = vmatmul.mubr.f32.gmra.mrb[0].mxu0 %v2119
  %v2474 = vpop.f32.mrb[0].mxu0
  %v2475 = vadd.f32 0.0, %v2474
  %v2476 = vpop.f32.mrb[0].mxu0
  %2477 = vmatprep.mubr.f32.mxu0 0.0
  %2478 = vmatmul.mubr.f32.gmra.mrb[0].mxu0 %v2122
  %v2479 = vpop.f32.mrb[0].mxu0
  %v2480 = vadd.f32 0.0, %v2479
  %v2481 = vpop.f32.mrb[0].mxu0
  %2482 = vmatprep.mubr.f32.mxu0 0.0
  %2483 = vmatmul.mubr.f32.gmra.mrb[0].mxu0 %v2125
  %v2484 = vpop.f32.mrb[0].mxu0
  %v2485 = vadd.f32 0.0, %v2484
  %v2486 = vpop.f32.mrb[0].mxu0
  %2487 = vmatprep.mubr.f32.mxu0 0.0
  %2488 = vmatmul.mubr.f32.gmra.mrb[0].mxu0 %v2128
  %v2489 = vpop.f32.mrb[0].mxu0
  %v2490 = vadd.f32 0.0, %v2489
  %v2491 = vpop.f32.mrb[0].mxu0
  %2492 = vmatprep.mubr.f32.mxu0 0.0
  %2493 = vmatmul.mubr.f32.gmra.mrb[0].mxu0 %v2131
  %v2494 = vpop.f32.mrb[0].mxu0
  %v2495 = vadd.f32 0.0, %v2494
  %v2496 = vpop.f32.mrb[0].mxu0
  %2497 = vmatprep.mubr.f32.mxu0 0.0
  %2498 = vmatmul.mubr.f32.gmra.mrb[0].mxu0 %v2134
  %v2499 = vpop.f32.mrb[0].mxu0
  %v2500 = vadd.f32 0.0, %v2499
  %v2501 = vpop.f32.mrb[0].mxu0
  %2502 = vmatprep.mubr.f32.mxu0 0.0
  %2503 = vmatmul.mubr.f32.gmra.mrb[0].mxu0 %v2137
  %v2504 = vpop.f32.mrb[0].mxu0
  %v2505 = vadd.f32 0.0, %v2504
  %v2506 = vpop.f32.mrb[0].mxu0
  %2507 = vmatprep.mubr.f32.mxu0 0.0
  %2508 = vmatmul.mubr.f32.gmra.mrb[0].mxu0 %v2140
  %v2509 = vpop.f32.mrb[0].mxu0
  %v2510 = vadd.f32 0.0, %v2509
  %v2511 = vpop.f32.mrb[0].mxu0
  %2512 = vmatprep.mubr.f32.mxu0 0.0
  %2513 = vmatmul.mubr.f32.gmra.mrb[0].mxu0 %v2143
  %v2514 = vpop.f32.mrb[0].mxu0
  %v2515 = vadd.f32 0.0, %v2514
  %v2516 = vpop.f32.mrb[0].mxu0
  %2517 = vmatprep.mubr.f32.mxu0 0.0
  %2518 = vmatmul.mubr.f32.gmra.mrb[0].mxu0 %v2146
  %v2519 = vpop.f32.mrb[0].mxu0
  %v2520 = vadd.f32 0.0, %v2519
  %v2521 = vpop.f32.mrb[0].mxu0
  %2522 = vmatprep.mubr.f32.mxu0 0.0
  %2523 = vmatmul.mubr.f32.gmra.mrb[0].mxu0 %v2149
  %v2524 = vpop.f32.mrb[0].mxu0
  %v2525 = vadd.f32 0.0, %v2524
  %v2526 = vpop.f32.mrb[0].mxu0
  %2527 = vmatprep.mubr.f32.mxu0 0.0
  %2528 = vmatmul.mubr.f32.gmra.mrb[0].mxu0 %v2152
  %v2529 = vpop.f32.mrb[0].mxu0
  %v2530 = vadd.f32 0.0, %v2529
  %v2531 = vpop.f32.mrb[0].mxu0
  %2532 = vmatprep.mubr.f32.mxu0 0.0
  %2533 = vmatmul.mubr.f32.gmra.mrb[0].mxu0 %v2155
  %v2534 = vpop.f32.mrb[0].mxu0
  %v2535 = vadd.f32 0.0, %v2534
  %v2536 = vpop.f32.mrb[0].mxu0
  %2537 = vmatprep.mubr.f32.mxu0 0.0
  %2538 = vmatmul.mubr.f32.gmra.mrb[0].mxu0 %v2158
  %v2539 = vpop.f32.mrb[0].mxu0
  %v2540 = vadd.f32 0.0, %v2539
  %v2541 = vpop.f32.mrb[0].mxu0
  %2542 = vmatprep.mubr.f32.mxu0 0.0
  %2543 = vmatmul.mubr.f32.gmra.mrb[0].mxu0 %v2161
  %v2544 = vpop.f32.mrb[0].mxu0
  %v2545 = vadd.f32 0.0, %v2544
  %v2546 = vpop.f32.mrb[0].mxu0
  %2547 = vmatprep.mubr.f32.mxu0 0.0
  %2548 = vmatmul.mubr.f32.gmra.mrb[0].mxu0 %v2164
  %v2549 = vpop.f32.mrb[0].mxu0
  %v2550 = vadd.f32 0.0, %v2549
  %v2551 = vpop.f32.mrb[0].mxu0
  %2552 = vmatprep.mubr.f32.mxu0 0.0
  %2553 = vmatmul.mubr.f32.gmra.mrb[0].mxu0 %v2167
  %v2554 = vpop.f32.mrb[0].mxu0
  %v2555 = vadd.f32 0.0, %v2554
  %v2556 = vpop.f32.mrb[0].mxu0
  %2557 = vdwg.mxu0
  %v2558 = vld [vmem:[%s5] sm:$0x1]
  %v2560 = vlaneseq
  %v2561 = vshrl.u32 %v2560, 7
  %v2562 = vsub.s32 0, %v2561
  %v2563 = vrot.slane %v2558, %v2562
  %v2565 = vmul.f32 %v2240, %v2563
  %v2566 = vmul.f32 %v2245, %v2563
  %v2567 = vmul.f32 %v2250, %v2563
  %v2568 = vmul.f32 %v2255, %v2563
  %v2569 = vmul.f32 %v2260, %v2563
  %v2570 = vmul.f32 %v2265, %v2563
  %v2571 = vmul.f32 %v2270, %v2563
  %v2572 = vmul.f32 %v2275, %v2563
  %v2573 = vmul.f32 %v2280, %v2563
  %v2574 = vmul.f32 %v2285, %v2563
  %v2575 = vmul.f32 %v2290, %v2563
  %v2576 = vmul.f32 %v2295, %v2563
  %v2577 = vmul.f32 %v2300, %v2563
  %v2578 = vmul.f32 %v2305, %v2563
  %v2579 = vmul.f32 %v2310, %v2563
  %v2580 = vmul.f32 %v2315, %v2563
  %v2581 = vmul.f32 %v2320, %v2563
  %v2582 = vmul.f32 %v2325, %v2563
  %v2583 = vmul.f32 %v2330, %v2563
  %v2584 = vmul.f32 %v2335, %v2563
  %v2585 = vmul.f32 %v2340, %v2563
  %v2586 = vmul.f32 %v2345, %v2563
  %v2587 = vmul.f32 %v2350, %v2563
  %v2588 = vmul.f32 %v2355, %v2563
  %v2589 = vmul.f32 %v2360, %v2563
  %v2590 = vmul.f32 %v2365, %v2563
  %v2591 = vmul.f32 %v2370, %v2563
  %v2592 = vmul.f32 %v2375, %v2563
  %v2593 = vmul.f32 %v2380, %v2563
  %v2594 = vmul.f32 %v2385, %v2563
  %v2595 = vmul.f32 %v2390, %v2563
  %v2596 = vmul.f32 %v2395, %v2563
  %v2597 = vmul.f32 %v2400, %v2563
  %v2598 = vmul.f32 %v2405, %v2563
  %v2599 = vmul.f32 %v2410, %v2563
  %v2600 = vmul.f32 %v2415, %v2563
  %v2601 = vmul.f32 %v2420, %v2563
  %v2602 = vmul.f32 %v2425, %v2563
  %v2603 = vmul.f32 %v2430, %v2563
  %v2604 = vmul.f32 %v2435, %v2563
  %v2605 = vmul.f32 %v2440, %v2563
  %v2606 = vmul.f32 %v2445, %v2563
  %v2607 = vmul.f32 %v2450, %v2563
  %v2608 = vmul.f32 %v2455, %v2563
  %v2609 = vmul.f32 %v2460, %v2563
  %v2610 = vmul.f32 %v2465, %v2563
  %v2611 = vmul.f32 %v2470, %v2563
  %v2612 = vmul.f32 %v2475, %v2563
  %v2613 = vmul.f32 %v2480, %v2563
  %v2614 = vmul.f32 %v2485, %v2563
  %v2615 = vmul.f32 %v2490, %v2563
  %v2616 = vmul.f32 %v2495, %v2563
  %v2617 = vmul.f32 %v2500, %v2563
  %v2618 = vmul.f32 %v2505, %v2563
  %v2619 = vmul.f32 %v2510, %v2563
  %v2620 = vmul.f32 %v2515, %v2563
  %v2621 = vmul.f32 %v2520, %v2563
  %v2622 = vmul.f32 %v2525, %v2563
  %v2623 = vmul.f32 %v2530, %v2563
  %v2624 = vmul.f32 %v2535, %v2563
  %v2625 = vmul.f32 %v2540, %v2563
  %v2626 = vmul.f32 %v2545, %v2563
  %v2627 = vmul.f32 %v2550, %v2563
  %v2628 = vmul.f32 %v2555, %v2563
  %v2629 = vld [vmem:[%s6] sm:$0x1]
  %v2631 = vlaneseq
  %v2632 = vshrl.u32 %v2631, 7
  %v2633 = vsub.s32 0, %v2632
  %v2634 = vrot.slane %v2629, %v2633
  %v2636 = vadd.f32 %v2565, %v2634
  %v2637 = vadd.f32 %v2566, %v2634
  %v2638 = vadd.f32 %v2567, %v2634
  %v2639 = vadd.f32 %v2568, %v2634
  %v2640 = vadd.f32 %v2569, %v2634
  %v2641 = vadd.f32 %v2570, %v2634
  %v2642 = vadd.f32 %v2571, %v2634
  %v2643 = vadd.f32 %v2572, %v2634
  %v2644 = vadd.f32 %v2573, %v2634
  %v2645 = vadd.f32 %v2574, %v2634
  %v2646 = vadd.f32 %v2575, %v2634
  %v2647 = vadd.f32 %v2576, %v2634
  %v2648 = vadd.f32 %v2577, %v2634
  %v2649 = vadd.f32 %v2578, %v2634
  %v2650 = vadd.f32 %v2579, %v2634
  %v2651 = vadd.f32 %v2580, %v2634
  %v2652 = vadd.f32 %v2581, %v2634
  %v2653 = vadd.f32 %v2582, %v2634
  %v2654 = vadd.f32 %v2583, %v2634
  %v2655 = vadd.f32 %v2584, %v2634
  %v2656 = vadd.f32 %v2585, %v2634
  %v2657 = vadd.f32 %v2586, %v2634
  %v2658 = vadd.f32 %v2587, %v2634
  %v2659 = vadd.f32 %v2588, %v2634
  %v2660 = vadd.f32 %v2589, %v2634
  %v2661 = vadd.f32 %v2590, %v2634
  %v2662 = vadd.f32 %v2591, %v2634
  %v2663 = vadd.f32 %v2592, %v2634
  %v2664 = vadd.f32 %v2593, %v2634
  %v2665 = vadd.f32 %v2594, %v2634
  %v2666 = vadd.f32 %v2595, %v2634
  %v2667 = vadd.f32 %v2596, %v2634
  %v2668 = vadd.f32 %v2597, %v2634
  %v2669 = vadd.f32 %v2598, %v2634
  %v2670 = vadd.f32 %v2599, %v2634
  %v2671 = vadd.f32 %v2600, %v2634
  %v2672 = vadd.f32 %v2601, %v2634
  %v2673 = vadd.f32 %v2602, %v2634
  %v2674 = vadd.f32 %v2603, %v2634
  %v2675 = vadd.f32 %v2604, %v2634
  %v2676 = vadd.f32 %v2605, %v2634
  %v2677 = vadd.f32 %v2606, %v2634
  %v2678 = vadd.f32 %v2607, %v2634
  %v2679 = vadd.f32 %v2608, %v2634
  %v2680 = vadd.f32 %v2609, %v2634
  %v2681 = vadd.f32 %v2610, %v2634
  %v2682 = vadd.f32 %v2611, %v2634
  %v2683 = vadd.f32 %v2612, %v2634
  %v2684 = vadd.f32 %v2613, %v2634
  %v2685 = vadd.f32 %v2614, %v2634
  %v2686 = vadd.f32 %v2615, %v2634
  %v2687 = vadd.f32 %v2616, %v2634
  %v2688 = vadd.f32 %v2617, %v2634
  %v2689 = vadd.f32 %v2618, %v2634
  %v2690 = vadd.f32 %v2619, %v2634
  %v2691 = vadd.f32 %v2620, %v2634
  %v2692 = vadd.f32 %v2621, %v2634
  %v2693 = vadd.f32 %v2622, %v2634
  %v2694 = vadd.f32 %v2623, %v2634
  %v2695 = vadd.f32 %v2624, %v2634
  %v2696 = vadd.f32 %v2625, %v2634
  %v2697 = vadd.f32 %v2626, %v2634
  %v2698 = vadd.f32 %v2627, %v2634
  %v2699 = vadd.f32 %v2628, %v2634
  %v2700 = vmax.f32 %v2636, 0.0
  %v2701 = vmax.f32 %v2637, 0.0
  %v2702 = vmax.f32 %v2638, 0.0
  %v2703 = vmax.f32 %v2639, 0.0
  %v2704 = vmax.f32 %v2640, 0.0
  %v2705 = vmax.f32 %v2641, 0.0
  %v2706 = vmax.f32 %v2642, 0.0
  %v2707 = vmax.f32 %v2643, 0.0
  %v2708 = vmax.f32 %v2644, 0.0
  %v2709 = vmax.f32 %v2645, 0.0
  %v2710 = vmax.f32 %v2646, 0.0
  %v2711 = vmax.f32 %v2647, 0.0
  %v2712 = vmax.f32 %v2648, 0.0
  %v2713 = vmax.f32 %v2649, 0.0
  %v2714 = vmax.f32 %v2650, 0.0
  %v2715 = vmax.f32 %v2651, 0.0
  %v2716 = vmax.f32 %v2652, 0.0
  %v2717 = vmax.f32 %v2653, 0.0
  %v2718 = vmax.f32 %v2654, 0.0
  %v2719 = vmax.f32 %v2655, 0.0
  %v2720 = vmax.f32 %v2656, 0.0
  %v2721 = vmax.f32 %v2657, 0.0
  %v2722 = vmax.f32 %v2658, 0.0
  %v2723 = vmax.f32 %v2659, 0.0
  %v2724 = vmax.f32 %v2660, 0.0
  %v2725 = vmax.f32 %v2661, 0.0
  %v2726 = vmax.f32 %v2662, 0.0
  %v2727 = vmax.f32 %v2663, 0.0
  %v2728 = vmax.f32 %v2664, 0.0
  %v2729 = vmax.f32 %v2665, 0.0
  %v2730 = vmax.f32 %v2666, 0.0
  %v2731 = vmax.f32 %v2667, 0.0
  %v2732 = vmax.f32 %v2668, 0.0
  %v2733 = vmax.f32 %v2669, 0.0
  %v2734 = vmax.f32 %v2670, 0.0
  %v2735 = vmax.f32 %v2671, 0.0
  %v2736 = vmax.f32 %v2672, 0.0
  %v2737 = vmax.f32 %v2673, 0.0
  %v2738 = vmax.f32 %v2674, 0.0
  %v2739 = vmax.f32 %v2675, 0.0
  %v2740 = vmax.f32 %v2676, 0.0
  %v2741 = vmax.f32 %v2677, 0.0
  %v2742 = vmax.f32 %v2678, 0.0
  %v2743 = vmax.f32 %v2679, 0.0
  %v2744 = vmax.f32 %v2680, 0.0
  %v2745 = vmax.f32 %v2681, 0.0
  %v2746 = vmax.f32 %v2682, 0.0
  %v2747 = vmax.f32 %v2683, 0.0
  %v2748 = vmax.f32 %v2684, 0.0
  %v2749 = vmax.f32 %v2685, 0.0
  %v2750 = vmax.f32 %v2686, 0.0
  %v2751 = vmax.f32 %v2687, 0.0
  %v2752 = vmax.f32 %v2688, 0.0
  %v2753 = vmax.f32 %v2689, 0.0
  %v2754 = vmax.f32 %v2690, 0.0
  %v2755 = vmax.f32 %v2691, 0.0
  %v2756 = vmax.f32 %v2692, 0.0
  %v2757 = vmax.f32 %v2693, 0.0
  %v2758 = vmax.f32 %v2694, 0.0
  %v2759 = vmax.f32 %v2695, 0.0
  %v2760 = vmax.f32 %v2696, 0.0
  %v2761 = vmax.f32 %v2697, 0.0
  %v2762 = vmax.f32 %v2698, 0.0
  %v2763 = vmax.f32 %v2699, 0.0
  %vm2764 = vcmask 64512
  %2765 = vst.msk [vmem:[%s7] sm:$0xff] %vm2764, %v2700
  %2766 = vst.msk [vmem:[%s7 + $0x8] sm:$0xff] %vm2764, %v2701
  %2767 = vst.msk [vmem:[%s7 + $0x10] sm:$0xff] %vm2764, %v2702
  %2768 = vst.msk [vmem:[%s7 + $0x18] sm:$0xff] %vm2764, %v2703
  %2769 = vst.msk [vmem:[%s7 + $0x20] sm:$0xff] %vm2764, %v2704
  %2770 = vst.msk [vmem:[%s7 + $0x28] sm:$0xff] %vm2764, %v2705
  %2771 = vst.msk [vmem:[%s7 + $0x30] sm:$0xff] %vm2764, %v2706
  %2772 = vst.msk [vmem:[%s7 + $0x38] sm:$0xff] %vm2764, %v2707
  %2773 = vst.msk [vmem:[%s7 + $0x40] sm:$0xff] %vm2764, %v2708
  %2774 = vst.msk [vmem:[%s7 + $0x48] sm:$0xff] %vm2764, %v2709
  %2775 = vst.msk [vmem:[%s7 + $0x50] sm:$0xff] %vm2764, %v2710
  %2776 = vst.msk [vmem:[%s7 + $0x58] sm:$0xff] %vm2764, %v2711
  %2777 = vst.msk [vmem:[%s7 + $0x60] sm:$0xff] %vm2764, %v2712
  %2778 = vst.msk [vmem:[%s7 + $0x68] sm:$0xff] %vm2764, %v2713
  %2779 = vst.msk [vmem:[%s7 + $0x70] sm:$0xff] %vm2764, %v2714
  %2780 = vst.msk [vmem:[%s7 + $0x78] sm:$0xff] %vm2764, %v2715
  %2781 = vst.msk [vmem:[%s7 + $0x80] sm:$0xff] %vm2764, %v2716
  %2782 = vst.msk [vmem:[%s7 + $0x88] sm:$0xff] %vm2764, %v2717
  %2783 = vst.msk [vmem:[%s7 + $0x90] sm:$0xff] %vm2764, %v2718
  %2784 = vst.msk [vmem:[%s7 + $0x98] sm:$0xff] %vm2764, %v2719
  %2785 = vst.msk [vmem:[%s7 + $0xa0] sm:$0xff] %vm2764, %v2720
  %2786 = vst.msk [vmem:[%s7 + $0xa8] sm:$0xff] %vm2764, %v2721
  %2787 = vst.msk [vmem:[%s7 + $0xb0] sm:$0xff] %vm2764, %v2722
  %2788 = vst.msk [vmem:[%s7 + $0xb8] sm:$0xff] %vm2764, %v2723
  %2789 = vst.msk [vmem:[%s7 + $0xc0] sm:$0xff] %vm2764, %v2724
  %2790 = vst.msk [vmem:[%s7 + $0xc8] sm:$0xff] %vm2764, %v2725
  %2791 = vst.msk [vmem:[%s7 + $0xd0] sm:$0xff] %vm2764, %v2726
  %2792 = vst.msk [vmem:[%s7 + $0xd8] sm:$0xff] %vm2764, %v2727
  %2793 = vst.msk [vmem:[%s7 + $0xe0] sm:$0xff] %vm2764, %v2728
  %2794 = vst.msk [vmem:[%s7 + $0xe8] sm:$0xff] %vm2764, %v2729
  %2795 = vst.msk [vmem:[%s7 + $0xf0] sm:$0xff] %vm2764, %v2730
  %2796 = vst.msk [vmem:[%s7 + $0xf8] sm:$0xff] %vm2764, %v2731
  %2797 = vst.msk [vmem:[%s7 + $0x100] sm:$0xff] %vm2764, %v2732
  %2798 = vst.msk [vmem:[%s7 + $0x108] sm:$0xff] %vm2764, %v2733
  %2799 = vst.msk [vmem:[%s7 + $0x110] sm:$0xff] %vm2764, %v2734
  %2800 = vst.msk [vmem:[%s7 + $0x118] sm:$0xff] %vm2764, %v2735
  %2801 = vst.msk [vmem:[%s7 + $0x120] sm:$0xff] %vm2764, %v2736
  %2802 = vst.msk [vmem:[%s7 + $0x128] sm:$0xff] %vm2764, %v2737
  %2803 = vst.msk [vmem:[%s7 + $0x130] sm:$0xff] %vm2764, %v2738
  %2804 = vst.msk [vmem:[%s7 + $0x138] sm:$0xff] %vm2764, %v2739
  %2805 = vst.msk [vmem:[%s7 + $0x140] sm:$0xff] %vm2764, %v2740
  %2806 = vst.msk [vmem:[%s7 + $0x148] sm:$0xff] %vm2764, %v2741
  %2807 = vst.msk [vmem:[%s7 + $0x150] sm:$0xff] %vm2764, %v2742
  %2808 = vst.msk [vmem:[%s7 + $0x158] sm:$0xff] %vm2764, %v2743
  %2809 = vst.msk [vmem:[%s7 + $0x160] sm:$0xff] %vm2764, %v2744
  %2810 = vst.msk [vmem:[%s7 + $0x168] sm:$0xff] %vm2764, %v2745
  %2811 = vst.msk [vmem:[%s7 + $0x170] sm:$0xff] %vm2764, %v2746
  %2812 = vst.msk [vmem:[%s7 + $0x178] sm:$0xff] %vm2764, %v2747
  %2813 = vst.msk [vmem:[%s7 + $0x180] sm:$0xff] %vm2764, %v2748
  %2814 = vst.msk [vmem:[%s7 + $0x188] sm:$0xff] %vm2764, %v2749
  %2815 = vst.msk [vmem:[%s7 + $0x190] sm:$0xff] %vm2764, %v2750
  %2816 = vst.msk [vmem:[%s7 + $0x198] sm:$0xff] %vm2764, %v2751
  %2817 = vst.msk [vmem:[%s7 + $0x1a0] sm:$0xff] %vm2764, %v2752
  %2818 = vst.msk [vmem:[%s7 + $0x1a8] sm:$0xff] %vm2764, %v2753
  %2819 = vst.msk [vmem:[%s7 + $0x1b0] sm:$0xff] %vm2764, %v2754
  %2820 = vst.msk [vmem:[%s7 + $0x1b8] sm:$0xff] %vm2764, %v2755
  %2821 = vst.msk [vmem:[%s7 + $0x1c0] sm:$0xff] %vm2764, %v2756
  %2822 = vst.msk [vmem:[%s7 + $0x1c8] sm:$0xff] %vm2764, %v2757
  %2823 = vst.msk [vmem:[%s7 + $0x1d0] sm:$0xff] %vm2764, %v2758
  %2824 = vst.msk [vmem:[%s7 + $0x1d8] sm:$0xff] %vm2764, %v2759
  %2825 = vst.msk [vmem:[%s7 + $0x1e0] sm:$0xff] %vm2764, %v2760
  %2826 = vst.msk [vmem:[%s7 + $0x1e8] sm:$0xff] %vm2764, %v2761
  %2827 = vst.msk [vmem:[%s7 + $0x1f0] sm:$0xff] %vm2764, %v2762
  %2828 = vst.msk [vmem:[%s7 + $0x1f8] sm:$0xff] %vm2764, %v2763
  // Predicated region
  $region30: #{separable_conv2d.1} parent=0 // pred_check
    _
  $region31: #{separable_conv2d.1} parent=0 // pred_check_branch
    %2830 = sbr.rel (0) target = $region33
  $region32: #{separable_conv2d.1} parent=0 // pred_region
    _
  $region33: #{separable_conv2d.1} parent=0 // pred_fallthru
    _
  // Predicated region
  $region34: #{separable_conv2d.1} parent=0 // pred_check
    _
  $region35: #{separable_conv2d.1} parent=0 // pred_check_branch
    %2832 = sbr.rel (0) target = $region37
  $region36: #{separable_conv2d.1} parent=0 // pred_region
    _
  $region37: #{separable_conv2d.1} parent=0 // pred_fallthru
    _

</llo_original>
